<compile_context>
chip_gen: v5e
topology: v5e:2x2
jax: 0.10.0
libtpu: 0.0.40
codegen_flags: <defaults>
</compile_context>

<pallas_src>
import functools

import jax
import jax.numpy as jnp
import numpy as np
from jax.experimental import pallas as pl
from jax.experimental.pallas import tpu as pltpu

_LANE = 128
_K = 3  # 3x3 conv


def _round_up(x, m):
    return -(-x // m) * m


def _pick_tile_h(H, W, cin, cout_pad, in_itemsize,
                 vmem_budget=16 << 20, target_rows=1024):
    """Largest divisor of H whose (double-buffered) blocks fit the VMEM budget."""
    wp = W + 2
    best = 1
    for th in range(1, H + 1):
        if H % th:
            continue
        in_bytes = ((th + 2) * wp + 2) * cin * in_itemsize
        out_bytes = th * wp * cout_pad * 4
        # 2x input + 2x output (double buffered) + 1x f32 accumulator.
        if 2 * in_bytes + 3 * out_bytes > vmem_budget:
            break
        best = th
        if th * W >= target_rows:
            break
    return best


def _make_kernel(th, W, Cin, cout_pad):
    wp = W + 2
    m = th * wp  # rows computed per step (includes 2 junk columns per image row)

    def kernel(x_ref, w_ref, b_ref, o_ref, acc_ref):
        # x_ref  : ((th+2)*wp + 2, Cin)   flattened halo'd padded-image slab
        # w_ref  : (9, Cin, cout_pad)
        # b_ref  : (1, cout_pad)           f32
        # o_ref  : (m, cout_pad)
        # acc_ref: VMEM (m, cout_pad)      f32 accumulator
        acc_ref[...] = jnp.broadcast_to(b_ref[...], (m, cout_pad))
        for dh in range(_K):
            for dw in range(_K):
                off = dh * wp + dw  # static shift on the flattened padded grid
                acc_ref[...] += jnp.dot(
                    x_ref[off:off + m, :], w_ref[dh * _K + dw],
                    preferred_element_type=jnp.float32)
        o_ref[...] = jnp.maximum(acc_ref[...], 0.0).astype(o_ref.dtype)

    return kernel


@functools.partial(jax.jit, static_argnames=("tile_h", "compute_dtype"))
def conv_relu(x_nchw, weight, bias, *, tile_h=None, compute_dtype=jnp.bfloat16):
    """3x3 conv (stride 1, padding 1) + ReLU.

    x_nchw : (B, Cin, H, W) float32
    weight : (Cout, Cin, 3, 3)  (PyTorch OIHW)
    bias   : (Cout,)
    returns: (B, Cout, H, W)
    """
    B, Cin, H, W = x_nchw.shape
    Cout = weight.shape[0]
    out_dtype = x_nchw.dtype
    cout_pad = _round_up(Cout, _LANE)
    wp = W + 2

    th = tile_h if tile_h is not None else _pick_tile_h(
        H, W, Cin, cout_pad, jnp.dtype(compute_dtype).itemsize)
    assert H % th == 0, "tile_h must divide H"
    n_t = H // th
    m = th * wp
    l_tile = (th + 2) * wp + 2

    # NCHW -> NHWC, zero-pad spatially by 1, flatten (H+2, W+2), plus two
    # trailing zero rows so every shifted slice in the kernel stays in bounds.
    x = jnp.transpose(x_nchw, (0, 2, 3, 1)).astype(compute_dtype)
    xp = jnp.pad(x, ((0, 0), (1, 1), (1, 1), (0, 0)))
    xp_flat = jnp.pad(xp.reshape(B, (H + 2) * wp, Cin),
                      ((0, 0), (0, 2), (0, 0)))

    # Overlapping (halo'd) row slabs: (B, n_t, l_tile, Cin).
    x_tiles = jnp.stack(
        [xp_flat[:, t * th * wp: t * th * wp + l_tile] for t in range(n_t)],
        axis=1)

    # weight OIHW -> (kh*kw, Cin, cout_pad); zero-padded Cout columns keep the
    # result exact while making the output lane-dense.
    w = jnp.transpose(weight, (2, 3, 1, 0)).reshape(_K * _K, Cin, Cout)
    w = jnp.pad(w, ((0, 0), (0, 0), (0, cout_pad - Cout))).astype(compute_dtype)
    b = jnp.pad(bias.astype(jnp.float32).reshape(1, Cout),
                ((0, 0), (0, cout_pad - Cout)))

    out = pl.pallas_call(
        _make_kernel(th, W, Cin, cout_pad),
        out_shape=jax.ShapeDtypeStruct((B, n_t, m, cout_pad), out_dtype),
        grid_spec=pltpu.PrefetchScalarGridSpec(
            num_scalar_prefetch=0,
            grid=(B, n_t),
            in_specs=[
                # If a trace shows exposed input DMA, add
                # pipeline_mode=pl.Buffered(3) to this spec.
                pl.BlockSpec((pl.Squeezed(), pl.Squeezed(), l_tile, Cin),
                             lambda bi, ti: (bi, ti, 0, 0)),
                pl.BlockSpec((_K * _K, Cin, cout_pad),
                             lambda bi, ti: (0, 0, 0)),      # weights resident
                pl.BlockSpec((1, cout_pad), lambda bi, ti: (0, 0)),
            ],
            out_specs=pl.BlockSpec((pl.Squeezed(), pl.Squeezed(), m, cout_pad),
                                   lambda bi, ti: (bi, ti, 0, 0)),
            scratch_shapes=[pltpu.VMEM((m, cout_pad), jnp.float32)],
        ),
        compiler_params=pltpu.CompilerParams(
            dimension_semantics=("parallel", "parallel")),
    )(x_tiles, w, b)

    # Drop junk columns (conv is computed on the padded-width grid) and the
    # Cout padding, then back to NCHW.
    out = out.reshape(B, n_t, th, wp, cout_pad)[:, :, :, :W, :Cout]
    out = out.reshape(B, H, W, Cout)
    # TODO(synk): callers that accept NHWC could skip this final transpose.
    return jnp.transpose(out, (0, 3, 1, 2))


if __name__ == "__main__":
    B, Cin, Cout, H, W = 2, 4, 8, 16, 16
    key = jax.random.PRNGKey(0)
    kx, kw, kb = jax.random.split(key, 3)

    x = jax.random.normal(kx, (B, Cin, H, W), dtype=jnp.float32)
    fan_in = Cin * 3 * 3
    bound = 1.0 / np.sqrt(fan_in)
    weight = jax.random.uniform(kw, (Cout, Cin, 3, 3), jnp.float32, -bound, bound)
    bias = jax.random.uniform(kb, (Cout,), jnp.float32, -bound, bound)

    def reference(xr, wr, br):
        r = jax.lax.conv_general_dilated(
            xr, wr, window_strides=(1, 1), padding=((1, 1), (1, 1)),
            dimension_numbers=("NCHW", "OIHW", "NCHW"),
            precision=jax.lax.Precision.HIGHEST)
        return jnp.maximum(r + br[None, :, None, None], 0.0)

    # Default bf16-operand path, tiled along H (exercises the halo logic).
    y = jax.block_until_ready(conv_relu(x, weight, bias, tile_h=8))
    xq = x.astype(jnp.bfloat16).astype(jnp.float32)
    wq = weight.astype(jnp.bfloat16).astype(jnp.float32)
    np.testing.assert_allclose(np.asarray(y), np.asarray(reference(xq, wq, bias)),
                               rtol=1e-3, atol=1e-3)

    # f32-operand path with the auto-chosen tile (single tile at this size).
    y32 = jax.block_until_ready(
        conv_relu(x, weight, bias, compute_dtype=jnp.float32))
    np.testing.assert_allclose(np.asarray(y32),
                               np.asarray(reference(x, weight, bias)),
                               rtol=1e-4, atol=1e-4)

    assert y.shape == (B, Cout, H, W)
    print("KERNEL_OK")
</pallas_src>

<mosaic_0001>
module attributes {stable_mosaic.version = 11 : i64} {
  func.func @kernel(%arg0: i32, %arg1: i32, %arg2: memref<1x1x182x4xbf16, #tpu.memory_space<vmem>>, %arg3: memref<9x4x128xbf16, #tpu.memory_space<vmem>>, %arg4: memref<1x128xf32, #tpu.memory_space<vmem>>, %arg5: memref<1x1x144x128xf32, #tpu.memory_space<vmem>>, %arg6: memref<144x128xf32, #tpu.memory_space<vmem>>) attributes {dimension_semantics = [#tpu.dimension_semantics<parallel>, #tpu.dimension_semantics<parallel>], iteration_bounds = array<i64: 2, 2>, scalar_prefetch = 0 : i64, scratch_operands = 1 : i64, tpu.core_type = #tpu.core_type<tc>, window_params = [{transform_indices = @transform_0, window_bounds = array<i64: 1, 1, 182, 4>}, {pipeline_mode = #tpu.pipeline_mode<synchronous>, transform_indices = @transform_1, window_bounds = array<i64: 9, 4, 128>}, {pipeline_mode = #tpu.pipeline_mode<synchronous>, transform_indices = @transform_2, window_bounds = array<i64: 1, 128>}, {transform_indices = @transform_3, window_bounds = array<i64: 1, 1, 144, 128>}]} {
    %c0 = arith.constant 0 : index
    %c0_0 = arith.constant 0 : index
    %0 = vector.load %arg4[%c0, %c0_0] : memref<1x128xf32, #tpu.memory_space<vmem>>, vector<1x128xf32>
    %1 = vector.shape_cast %0 : vector<1x128xf32> to vector<1x128xf32>
    %2 = vector.broadcast %1 : vector<1x128xf32> to vector<144x128xf32>
    %c0_1 = arith.constant 0 : index
    %c0_2 = arith.constant 0 : index
    %3 = vector.load %arg6[%c0_1, %c0_2] : memref<144x128xf32, #tpu.memory_space<vmem>>, vector<144x128xf32>
    tpu.vector_store %arg6[%c0_1, %c0_2], %2 {strides = array<i32>} : memref<144x128xf32, #tpu.memory_space<vmem>>, vector<144x128xf32>,
    %c0_3 = arith.constant 0 : index
    %c0_4 = arith.constant 0 : index
    %4 = vector.load %arg6[%c0_3, %c0_4] : memref<144x128xf32, #tpu.memory_space<vmem>>, vector<144x128xf32>
    %c0_5 = arith.constant 0 : index
    %c0_6 = arith.constant 0 : index
    %c0_7 = arith.constant 0 : index
    %c0_8 = arith.constant 0 : index
    %5 = vector.load %arg2[%c0_5, %c0_6, %c0_7, %c0_8] : memref<1x1x182x4xbf16, #tpu.memory_space<vmem>>, vector<1x1x144x4xbf16>
    %6 = vector.shape_cast %5 : vector<1x1x144x4xbf16> to vector<144x4xbf16>
    %c0_9 = arith.constant 0 : index
    %c0_10 = arith.constant 0 : index
    %c0_11 = arith.constant 0 : index
    %7 = vector.load %arg3[%c0_9, %c0_10, %c0_11] : memref<9x4x128xbf16, #tpu.memory_space<vmem>>, vector<1x4x128xbf16>
    %8 = vector.shape_cast %7 : vector<1x4x128xbf16> to vector<4x128xbf16>
    %cst = arith.constant dense<0.000000e+00> : vector<144x128xf32>
    %9 = tpu.matmul %6, %8, %cst {dimension_numbers = #tpu.dot_dimension_numbers<[1], [0], [0], [1], [0, 0, 1, 1], [], []>} : vector<144x4xbf16>, vector<4x128xbf16>, vector<144x128xf32> -> vector<144x128xf32>
    %10 = arith.addf %4, %9 : vector<144x128xf32>
    %c0_12 = arith.constant 0 : index
    %c0_13 = arith.constant 0 : index
    %11 = vector.load %arg6[%c0_12, %c0_13] : memref<144x128xf32, #tpu.memory_space<vmem>>, vector<144x128xf32>
    tpu.vector_store %arg6[%c0_12, %c0_13], %10 {strides = array<i32>} : memref<144x128xf32, #tpu.memory_space<vmem>>, vector<144x128xf32>,
    %c0_14 = arith.constant 0 : index
    %c0_15 = arith.constant 0 : index
    %12 = vector.load %arg6[%c0_14, %c0_15] : memref<144x128xf32, #tpu.memory_space<vmem>>, vector<144x128xf32>
    %c0_16 = arith.constant 0 : index
    %c0_17 = arith.constant 0 : index
    %c1 = arith.constant 1 : index
    %c0_18 = arith.constant 0 : index
    %13 = vector.load %arg2[%c0_16, %c0_17, %c1, %c0_18] : memref<1x1x182x4xbf16, #tpu.memory_space<vmem>>, vector<1x1x144x4xbf16>
    %14 = vector.shape_cast %13 : vector<1x1x144x4xbf16> to vector<144x4xbf16>
    %c1_19 = arith.constant 1 : index
    %c0_20 = arith.constant 0 : index
    %c0_21 = arith.constant 0 : index
    %15 = vector.load %arg3[%c1_19, %c0_20, %c0_21] : memref<9x4x128xbf16, #tpu.memory_space<vmem>>, vector<1x4x128xbf16>
    %16 = vector.shape_cast %15 : vector<1x4x128xbf16> to vector<4x128xbf16>
    %cst_22 = arith.constant dense<0.000000e+00> : vector<144x128xf32>
    %17 = tpu.matmul %14, %16, %cst_22 {dimension_numbers = #tpu.dot_dimension_numbers<[1], [0], [0], [1], [0, 0, 1, 1], [], []>} : vector<144x4xbf16>, vector<4x128xbf16>, vector<144x128xf32> -> vector<144x128xf32>
    %18 = arith.addf %12, %17 : vector<144x128xf32>
    %c0_23 = arith.constant 0 : index
    %c0_24 = arith.constant 0 : index
    %19 = vector.load %arg6[%c0_23, %c0_24] : memref<144x128xf32, #tpu.memory_space<vmem>>, vector<144x128xf32>
    tpu.vector_store %arg6[%c0_23, %c0_24], %18 {strides = array<i32>} : memref<144x128xf32, #tpu.memory_space<vmem>>, vector<144x128xf32>,
    %c0_25 = arith.constant 0 : index
    %c0_26 = arith.constant 0 : index
    %20 = vector.load %arg6[%c0_25, %c0_26] : memref<144x128xf32, #tpu.memory_space<vmem>>, vector<144x128xf32>
    %c0_27 = arith.constant 0 : index
    %c0_28 = arith.constant 0 : index
    %c2 = arith.constant 2 : index
    %c0_29 = arith.constant 0 : index
    %21 = vector.load %arg2[%c0_27, %c0_28, %c2, %c0_29] : memref<1x1x182x4xbf16, #tpu.memory_space<vmem>>, vector<1x1x144x4xbf16>
    %22 = vector.shape_cast %21 : vector<1x1x144x4xbf16> to vector<144x4xbf16>
    %c2_30 = arith.constant 2 : index
    %c0_31 = arith.constant 0 : index
    %c0_32 = arith.constant 0 : index
    %23 = vector.load %arg3[%c2_30, %c0_31, %c0_32] : memref<9x4x128xbf16, #tpu.memory_space<vmem>>, vector<1x4x128xbf16>
    %24 = vector.shape_cast %23 : vector<1x4x128xbf16> to vector<4x128xbf16>
    %cst_33 = arith.constant dense<0.000000e+00> : vector<144x128xf32>
    %25 = tpu.matmul %22, %24, %cst_33 {dimension_numbers = #tpu.dot_dimension_numbers<[1], [0], [0], [1], [0, 0, 1, 1], [], []>} : vector<144x4xbf16>, vector<4x128xbf16>, vector<144x128xf32> -> vector<144x128xf32>
    %26 = arith.addf %20, %25 : vector<144x128xf32>
    %c0_34 = arith.constant 0 : index
    %c0_35 = arith.constant 0 : index
    %27 = vector.load %arg6[%c0_34, %c0_35] : memref<144x128xf32, #tpu.memory_space<vmem>>, vector<144x128xf32>
    tpu.vector_store %arg6[%c0_34, %c0_35], %26 {strides = array<i32>} : memref<144x128xf32, #tpu.memory_space<vmem>>, vector<144x128xf32>,
    %c0_36 = arith.constant 0 : index
    %c0_37 = arith.constant 0 : index
    %28 = vector.load %arg6[%c0_36, %c0_37] : memref<144x128xf32, #tpu.memory_space<vmem>>, vector<144x128xf32>
    %c0_38 = arith.constant 0 : index
    %c0_39 = arith.constant 0 : index
    %c18 = arith.constant 18 : index
    %c0_40 = arith.constant 0 : index
    %29 = vector.load %arg2[%c0_38, %c0_39, %c18, %c0_40] : memref<1x1x182x4xbf16, #tpu.memory_space<vmem>>, vector<1x1x144x4xbf16>
    %30 = vector.shape_cast %29 : vector<1x1x144x4xbf16> to vector<144x4xbf16>
    %c3 = arith.constant 3 : index
    %c0_41 = arith.constant 0 : index
    %c0_42 = arith.constant 0 : index
    %31 = vector.load %arg3[%c3, %c0_41, %c0_42] : memref<9x4x128xbf16, #tpu.memory_space<vmem>>, vector<1x4x128xbf16>
    %32 = vector.shape_cast %31 : vector<1x4x128xbf16> to vector<4x128xbf16>
    %cst_43 = arith.constant dense<0.000000e+00> : vector<144x128xf32>
    %33 = tpu.matmul %30, %32, %cst_43 {dimension_numbers = #tpu.dot_dimension_numbers<[1], [0], [0], [1], [0, 0, 1, 1], [], []>} : vector<144x4xbf16>, vector<4x128xbf16>, vector<144x128xf32> -> vector<144x128xf32>
    %34 = arith.addf %28, %33 : vector<144x128xf32>
    %c0_44 = arith.constant 0 : index
    %c0_45 = arith.constant 0 : index
    %35 = vector.load %arg6[%c0_44, %c0_45] : memref<144x128xf32, #tpu.memory_space<vmem>>, vector<144x128xf32>
    tpu.vector_store %arg6[%c0_44, %c0_45], %34 {strides = array<i32>} : memref<144x128xf32, #tpu.memory_space<vmem>>, vector<144x128xf32>,
    %c0_46 = arith.constant 0 : index
    %c0_47 = arith.constant 0 : index
    %36 = vector.load %arg6[%c0_46, %c0_47] : memref<144x128xf32, #tpu.memory_space<vmem>>, vector<144x128xf32>
    %c0_48 = arith.constant 0 : index
    %c0_49 = arith.constant 0 : index
    %c19 = arith.constant 19 : index
    %c0_50 = arith.constant 0 : index
    %37 = vector.load %arg2[%c0_48, %c0_49, %c19, %c0_50] : memref<1x1x182x4xbf16, #tpu.memory_space<vmem>>, vector<1x1x144x4xbf16>
    %38 = vector.shape_cast %37 : vector<1x1x144x4xbf16> to vector<144x4xbf16>
    %c4 = arith.constant 4 : index
    %c0_51 = arith.constant 0 : index
    %c0_52 = arith.constant 0 : index
    %39 = vector.load %arg3[%c4, %c0_51, %c0_52] : memref<9x4x128xbf16, #tpu.memory_space<vmem>>, vector<1x4x128xbf16>
    %40 = vector.shape_cast %39 : vector<1x4x128xbf16> to vector<4x128xbf16>
    %cst_53 = arith.constant dense<0.000000e+00> : vector<144x128xf32>
    %41 = tpu.matmul %38, %40, %cst_53 {dimension_numbers = #tpu.dot_dimension_numbers<[1], [0], [0], [1], [0, 0, 1, 1], [], []>} : vector<144x4xbf16>, vector<4x128xbf16>, vector<144x128xf32> -> vector<144x128xf32>
    %42 = arith.addf %36, %41 : vector<144x128xf32>
    %c0_54 = arith.constant 0 : index
    %c0_55 = arith.constant 0 : index
    %43 = vector.load %arg6[%c0_54, %c0_55] : memref<144x128xf32, #tpu.memory_space<vmem>>, vector<144x128xf32>
    tpu.vector_store %arg6[%c0_54, %c0_55], %42 {strides = array<i32>} : memref<144x128xf32, #tpu.memory_space<vmem>>, vector<144x128xf32>,
    %c0_56 = arith.constant 0 : index
    %c0_57 = arith.constant 0 : index
    %44 = vector.load %arg6[%c0_56, %c0_57] : memref<144x128xf32, #tpu.memory_space<vmem>>, vector<144x128xf32>
    %c0_58 = arith.constant 0 : index
    %c0_59 = arith.constant 0 : index
    %c20 = arith.constant 20 : index
    %c0_60 = arith.constant 0 : index
    %45 = vector.load %arg2[%c0_58, %c0_59, %c20, %c0_60] : memref<1x1x182x4xbf16, #tpu.memory_space<vmem>>, vector<1x1x144x4xbf16>
    %46 = vector.shape_cast %45 : vector<1x1x144x4xbf16> to vector<144x4xbf16>
    %c5 = arith.constant 5 : index
    %c0_61 = arith.constant 0 : index
    %c0_62 = arith.constant 0 : index
    %47 = vector.load %arg3[%c5, %c0_61, %c0_62] : memref<9x4x128xbf16, #tpu.memory_space<vmem>>, vector<1x4x128xbf16>
    %48 = vector.shape_cast %47 : vector<1x4x128xbf16> to vector<4x128xbf16>
    %cst_63 = arith.constant dense<0.000000e+00> : vector<144x128xf32>
    %49 = tpu.matmul %46, %48, %cst_63 {dimension_numbers = #tpu.dot_dimension_numbers<[1], [0], [0], [1], [0, 0, 1, 1], [], []>} : vector<144x4xbf16>, vector<4x128xbf16>, vector<144x128xf32> -> vector<144x128xf32>
    %50 = arith.addf %44, %49 : vector<144x128xf32>
    %c0_64 = arith.constant 0 : index
    %c0_65 = arith.constant 0 : index
    %51 = vector.load %arg6[%c0_64, %c0_65] : memref<144x128xf32, #tpu.memory_space<vmem>>, vector<144x128xf32>
    tpu.vector_store %arg6[%c0_64, %c0_65], %50 {strides = array<i32>} : memref<144x128xf32, #tpu.memory_space<vmem>>, vector<144x128xf32>,
    %c0_66 = arith.constant 0 : index
    %c0_67 = arith.constant 0 : index
    %52 = vector.load %arg6[%c0_66, %c0_67] : memref<144x128xf32, #tpu.memory_space<vmem>>, vector<144x128xf32>
    %c0_68 = arith.constant 0 : index
    %c0_69 = arith.constant 0 : index
    %c36 = arith.constant 36 : index
    %c0_70 = arith.constant 0 : index
    %53 = vector.load %arg2[%c0_68, %c0_69, %c36, %c0_70] : memref<1x1x182x4xbf16, #tpu.memory_space<vmem>>, vector<1x1x144x4xbf16>
    %54 = vector.shape_cast %53 : vector<1x1x144x4xbf16> to vector<144x4xbf16>
    %c6 = arith.constant 6 : index
    %c0_71 = arith.constant 0 : index
    %c0_72 = arith.constant 0 : index
    %55 = vector.load %arg3[%c6, %c0_71, %c0_72] : memref<9x4x128xbf16, #tpu.memory_space<vmem>>, vector<1x4x128xbf16>
    %56 = vector.shape_cast %55 : vector<1x4x128xbf16> to vector<4x128xbf16>
    %cst_73 = arith.constant dense<0.000000e+00> : vector<144x128xf32>
    %57 = tpu.matmul %54, %56, %cst_73 {dimension_numbers = #tpu.dot_dimension_numbers<[1], [0], [0], [1], [0, 0, 1, 1], [], []>} : vector<144x4xbf16>, vector<4x128xbf16>, vector<144x128xf32> -> vector<144x128xf32>
    %58 = arith.addf %52, %57 : vector<144x128xf32>
    %c0_74 = arith.constant 0 : index
    %c0_75 = arith.constant 0 : index
    %59 = vector.load %arg6[%c0_74, %c0_75] : memref<144x128xf32, #tpu.memory_space<vmem>>, vector<144x128xf32>
    tpu.vector_store %arg6[%c0_74, %c0_75], %58 {strides = array<i32>} : memref<144x128xf32, #tpu.memory_space<vmem>>, vector<144x128xf32>,
    %c0_76 = arith.constant 0 : index
    %c0_77 = arith.constant 0 : index
    %60 = vector.load %arg6[%c0_76, %c0_77] : memref<144x128xf32, #tpu.memory_space<vmem>>, vector<144x128xf32>
    %c0_78 = arith.constant 0 : index
    %c0_79 = arith.constant 0 : index
    %c37 = arith.constant 37 : index
    %c0_80 = arith.constant 0 : index
    %61 = vector.load %arg2[%c0_78, %c0_79, %c37, %c0_80] : memref<1x1x182x4xbf16, #tpu.memory_space<vmem>>, vector<1x1x144x4xbf16>
    %62 = vector.shape_cast %61 : vector<1x1x144x4xbf16> to vector<144x4xbf16>
    %c7 = arith.constant 7 : index
    %c0_81 = arith.constant 0 : index
    %c0_82 = arith.constant 0 : index
    %63 = vector.load %arg3[%c7, %c0_81, %c0_82] : memref<9x4x128xbf16, #tpu.memory_space<vmem>>, vector<1x4x128xbf16>
    %64 = vector.shape_cast %63 : vector<1x4x128xbf16> to vector<4x128xbf16>
    %cst_83 = arith.constant dense<0.000000e+00> : vector<144x128xf32>
    %65 = tpu.matmul %62, %64, %cst_83 {dimension_numbers = #tpu.dot_dimension_numbers<[1], [0], [0], [1], [0, 0, 1, 1], [], []>} : vector<144x4xbf16>, vector<4x128xbf16>, vector<144x128xf32> -> vector<144x128xf32>
    %66 = arith.addf %60, %65 : vector<144x128xf32>
    %c0_84 = arith.constant 0 : index
    %c0_85 = arith.constant 0 : index
    %67 = vector.load %arg6[%c0_84, %c0_85] : memref<144x128xf32, #tpu.memory_space<vmem>>, vector<144x128xf32>
    tpu.vector_store %arg6[%c0_84, %c0_85], %66 {strides = array<i32>} : memref<144x128xf32, #tpu.memory_space<vmem>>, vector<144x128xf32>,
    %c0_86 = arith.constant 0 : index
    %c0_87 = arith.constant 0 : index
    %68 = vector.load %arg6[%c0_86, %c0_87] : memref<144x128xf32, #tpu.memory_space<vmem>>, vector<144x128xf32>
    %c0_88 = arith.constant 0 : index
    %c0_89 = arith.constant 0 : index
    %c38 = arith.constant 38 : index
    %c0_90 = arith.constant 0 : index
    %69 = vector.load %arg2[%c0_88, %c0_89, %c38, %c0_90] : memref<1x1x182x4xbf16, #tpu.memory_space<vmem>>, vector<1x1x144x4xbf16>
    %70 = vector.shape_cast %69 : vector<1x1x144x4xbf16> to vector<144x4xbf16>
    %c8 = arith.constant 8 : index
    %c0_91 = arith.constant 0 : index
    %c0_92 = arith.constant 0 : index
    %71 = vector.load %arg3[%c8, %c0_91, %c0_92] : memref<9x4x128xbf16, #tpu.memory_space<vmem>>, vector<1x4x128xbf16>
    %72 = vector.shape_cast %71 : vector<1x4x128xbf16> to vector<4x128xbf16>
    %cst_93 = arith.constant dense<0.000000e+00> : vector<144x128xf32>
    %73 = tpu.matmul %70, %72, %cst_93 {dimension_numbers = #tpu.dot_dimension_numbers<[1], [0], [0], [1], [0, 0, 1, 1], [], []>} : vector<144x4xbf16>, vector<4x128xbf16>, vector<144x128xf32> -> vector<144x128xf32>
    %74 = arith.addf %68, %73 : vector<144x128xf32>
    %c0_94 = arith.constant 0 : index
    %c0_95 = arith.constant 0 : index
    %75 = vector.load %arg6[%c0_94, %c0_95] : memref<144x128xf32, #tpu.memory_space<vmem>>, vector<144x128xf32>
    tpu.vector_store %arg6[%c0_94, %c0_95], %74 {strides = array<i32>} : memref<144x128xf32, #tpu.memory_space<vmem>>, vector<144x128xf32>,
    %c0_96 = arith.constant 0 : index
    %c0_97 = arith.constant 0 : index
    %76 = vector.load %arg6[%c0_96, %c0_97] : memref<144x128xf32, #tpu.memory_space<vmem>>, vector<144x128xf32>
    %cst_98 = arith.constant 0.000000e+00 : f32
    %77 = vector.broadcast %cst_98 : f32 to vector<144x128xf32>
    %78 = arith.maximumf %76, %77 : vector<144x128xf32>
    %c0_99 = arith.constant 0 : index
    %c0_100 = arith.constant 0 : index
    %c0_101 = arith.constant 0 : index
    %c0_102 = arith.constant 0 : index
    %79 = vector.load %arg5[%c0_99, %c0_100, %c0_101, %c0_102] : memref<1x1x144x128xf32, #tpu.memory_space<vmem>>, vector<1x1x144x128xf32>
    %80 = vector.shape_cast %79 : vector<1x1x144x128xf32> to vector<144x128xf32>
    %81 = vector.shape_cast %78 : vector<144x128xf32> to vector<1x1x144x128xf32>
    tpu.vector_store %arg5[%c0_99, %c0_100, %c0_101, %c0_102], %81 {strides = array<i32>} : memref<1x1x144x128xf32, #tpu.memory_space<vmem>>, vector<1x1x144x128xf32>,
    return
  }
  func.func @transform_0(%arg0: i32, %arg1: i32) -> (i32, i32, i32, i32) {
    %c0_i32 = arith.constant 0 : i32
    %c0_i32_0 = arith.constant 0 : i32
    %c0_i32_1 = arith.constant 0 : i32
    return %arg0, %arg1, %c0_i32, %c0_i32_0 : i32, i32, i32, i32
  }
  func.func @transform_1(%arg0: i32, %arg1: i32) -> (i32, i32, i32) {
    %c0_i32 = arith.constant 0 : i32
    %c0_i32_0 = arith.constant 0 : i32
    %c0_i32_1 = arith.constant 0 : i32
    %c0_i32_2 = arith.constant 0 : i32
    return %c0_i32, %c0_i32_0, %c0_i32_1 : i32, i32, i32
  }
  func.func @transform_2(%arg0: i32, %arg1: i32) -> (i32, i32) {
    %c0_i32 = arith.constant 0 : i32
    %c0_i32_0 = arith.constant 0 : i32
    %c0_i32_1 = arith.constant 0 : i32
    return %c0_i32, %c0_i32_0 : i32, i32
  }
  func.func @transform_3(%arg0: i32, %arg1: i32) -> (i32, i32, i32, i32) {
    %c0_i32 = arith.constant 0 : i32
    %c0_i32_0 = arith.constant 0 : i32
    %c0_i32_1 = arith.constant 0 : i32
    return %arg0, %arg1, %c0_i32, %c0_i32_0 : i32, i32, i32, i32
  }
}

</mosaic_0001>

<llo_original>
// kernel: conv_relu.1
$region0: #{conv_relu.1}
  #allocation0 [shape = 'u32[]', space=smem, size = 0x4, offset = 0x4, fixed_abs, tag = 'smem constant byte address 0x4 - core index']
  #allocation1 [shape = 'u32[72,128]{1,0:T(1,128)}', space=vmem, size = 0x9000, scoped, tag = 'internal scratch']
  #allocation2 [shape = 'f32[144,128]{1,0:T(8,128)}', space=vmem, size = 0x12000, scoped, tag = 'scratch operand']
  %s0 = inlined_call_operand.vmem [shape: bf16[2,2,182,4], index: 0, kind: input, shape index: {}]
  %s1 = inlined_call_operand.vmem [shape: bf16[9,4,128], index: 1, kind: input, shape index: {}]
  %s2 = inlined_call_operand.vmem [shape: f32[1,128], index: 2, kind: input, shape index: {}]
  %s3 = inlined_call_operand.vmem [shape: f32[2,2,144,128], index: 3, kind: output, shape index: {}]
  %s4 = sld [smem:[#allocation0]]
  $region45: #{conv_relu.1} parent=0
    _
  %s6 = ssub.s32 1, %s4
  %s7 = scalar_select 0, %s6, %s4
  loop: start=0, step=1, limit=6
  $region2: #{conv_relu.1} parent=0 // loop_pre_header
    _
  $region3: #{conv_relu.1} parent=0 // loop_header
    %s9 = sphi 0, %s13
    %p10 = scmp.ge.s32.totalorder %s9, 6
    %s16 = sphi 0, %s28
    %s17 = sphi 0, %s24
    %s18 = sphi 0, %s16
    %s19 = sphi 0, %s17
    %s20 = sphi 0, %s18
    %s21 = sphi 0, %s19
    %s33 = sphi 0, %s35
    %s36 = sphi 0, %s33
    %s37 = sphi 0, %s36
    %s53 = sphi 0, %s37
    %s57 = sphi 0, %s57
    %s59 = sphi 0, %s57
    %s60 = sphi 0, %s59
    %s74 = sphi 0, %s60
    %s78 = sphi 0, %s78
    %s80 = sphi 0, %s78
    %s81 = sphi 0, %s80
    %s95 = sphi 0, %s81
    %s103 = sphi 0, %s105
    %s106 = sphi 0, %s103
    %s107 = sphi 0, %s106
    %s123 = sphi 0, %s107
  $region4: #{conv_relu.1} parent=0 // loop_header_branch
    %12 = sbr.rel (%p10) target = $region8
  $region5: #{conv_relu.1} parent=0 // loop_body
    %s14 = ssub.s32 %s9, 1
    %s15 = ssub.s32 %s9, 2
    %s22 = sadd.s32 1, %s17
    %p23 = scmp.ge.s32.totalorder %s22, 2
    %s24 = scalar_select %p23, 0, %s22
    %s25 = sadd.s32 1, %s16
    %s26 = scalar_select %p23, %s25, %s16
    %p27 = scmp.ge.s32.totalorder %s26, 2
    %s28 = scalar_select %p27, 0, %s26
    %s29 = ssub.s32 %s16, %s28
    %s30 = ssub.s32 %s17, %s24
    %s31 = sor.u32 %s29, %s30
    %p32 = scmp.eq.s32.totalorder %s31, 0
    %s34 = sadd.s32 %s33, 1
    %s35 = scalar_select %p32, %s33, %s34
    %p38 = pneg %p32
    %p39 = scmp.eq.s32.totalorder %s9, 3
    %p40 = por %p38, %p39
    %p41 = scmp.ne.s32.totalorder %s33, %s36
    %p42 = scmp.eq.s32.totalorder %s9, 0
    %p43 = por %p41, %p42
    %p44 = scmp.ne.s32.totalorder %s33, %s36
    %p45 = scmp.eq.s32.totalorder %s14, 3
    %p46 = por %p44, %p45
    %p47 = scmp.ne.s32.totalorder %s36, %s37
    %p48 = scmp.eq.s32.totalorder %s14, 0
    %p49 = por %p47, %p48
    %p50 = scmp.ne.s32.totalorder %s36, %s37
    %p51 = scmp.eq.s32.totalorder %s15, 3
    %p52 = por %p50, %p51
    %p54 = scmp.ne.s32.totalorder %s37, %s53
    %p55 = scmp.eq.s32.totalorder %s15, 0
    %p56 = por %p54, %p55
    %s58 = sadd.s32 %s57, 1
    %p61 = scmp.eq.s32.totalorder %s9, 3
    %p62 = scmp.ne.s32.totalorder %s57, %s59
    %p63 = scmp.eq.s32.totalorder %s9, 0
    %p64 = por %p62, %p63
    %p65 = scmp.ne.s32.totalorder %s57, %s59
    %p66 = scmp.eq.s32.totalorder %s14, 3
    %p67 = por %p65, %p66
    %p68 = scmp.ne.s32.totalorder %s59, %s60
    %p69 = scmp.eq.s32.totalorder %s14, 0
    %p70 = por %p68, %p69
    %p71 = scmp.ne.s32.totalorder %s59, %s60
    %p72 = scmp.eq.s32.totalorder %s15, 3
    %p73 = por %p71, %p72
    %p75 = scmp.ne.s32.totalorder %s60, %s74
    %p76 = scmp.eq.s32.totalorder %s15, 0
    %p77 = por %p75, %p76
    %s79 = sadd.s32 %s78, 1
    %p82 = scmp.eq.s32.totalorder %s9, 3
    %p83 = scmp.ne.s32.totalorder %s78, %s80
    %p84 = scmp.eq.s32.totalorder %s9, 0
    %p85 = por %p83, %p84
    %p86 = scmp.ne.s32.totalorder %s78, %s80
    %p87 = scmp.eq.s32.totalorder %s14, 3
    %p88 = por %p86, %p87
    %p89 = scmp.ne.s32.totalorder %s80, %s81
    %p90 = scmp.eq.s32.totalorder %s14, 0
    %p91 = por %p89, %p90
    %p92 = scmp.ne.s32.totalorder %s80, %s81
    %p93 = scmp.eq.s32.totalorder %s15, 3
    %p94 = por %p92, %p93
    %p96 = scmp.ne.s32.totalorder %s81, %s95
    %p97 = scmp.eq.s32.totalorder %s15, 0
    %p98 = por %p96, %p97
    %s99 = ssub.s32 %s16, %s28
    %s100 = ssub.s32 %s17, %s24
    %s101 = sor.u32 %s99, %s100
    %p102 = scmp.eq.s32.totalorder %s101, 0
    %s104 = sadd.s32 %s103, 1
    %s105 = scalar_select %p102, %s103, %s104
    %p108 = pneg %p102
    %p109 = scmp.eq.s32.totalorder %s9, 3
    %p110 = por %p108, %p109
    %p111 = scmp.ne.s32.totalorder %s103, %s106
    %p112 = scmp.eq.s32.totalorder %s9, 0
    %p113 = por %p111, %p112
    %p114 = scmp.ne.s32.totalorder %s103, %s106
    %p115 = scmp.eq.s32.totalorder %s14, 3
    %p116 = por %p114, %p115
    %p117 = scmp.ne.s32.totalorder %s106, %s107
    %p118 = scmp.eq.s32.totalorder %s14, 0
    %p119 = por %p117, %p118
    %p120 = scmp.ne.s32.totalorder %s106, %s107
    %p121 = scmp.eq.s32.totalorder %s15, 3
    %p122 = por %p120, %p121
    %p124 = scmp.ne.s32.totalorder %s107, %s123
    %p125 = scmp.eq.s32.totalorder %s15, 0
    %p126 = por %p124, %p125
    %p127 = scmp.le.s32.totalorder 1, %s9
    %p128 = scmp.lt.s32.totalorder %s9, 5
    %p129 = pnand %p127, %p128
    %p130 = pneg %p129
    // Predicated region
    $region9: #{conv_relu.1} parent=5 // pred_check
      _
    $region10: #{conv_relu.1} parent=5 // pred_check_branch
      %132 = sbr.rel (%p129) target = $region12
    $region11: #{conv_relu.1} parent=5 // pred_region
      %s133 = ssub.s32 %s9, 1
      // Predicated region
      $region13: #{conv_relu.1} parent=11 // pred_check
        %p134 = pneg %p70
      $region14: #{conv_relu.1} parent=11 // pred_check_branch
        %136 = sbr.rel (%p134) target = $region16
      $region15: #{conv_relu.1} parent=11 // pred_region
        _
      $region16: #{conv_relu.1} parent=11 // pred_fallthru
        _
      // Predicated region
      $region17: #{conv_relu.1} parent=11 // pred_check
        %p137 = pneg %p91
      $region18: #{conv_relu.1} parent=11 // pred_check_branch
        %139 = sbr.rel (%p137) target = $region20
      $region19: #{conv_relu.1} parent=11 // pred_region
        _
      $region20: #{conv_relu.1} parent=11 // pred_fallthru
        _
    $region12: #{conv_relu.1} parent=5 // pred_fallthru
      _
    %p140 = scmp.lt.s32.totalorder %s9, 4
    // Predicated region
    $region21: #{conv_relu.1} parent=5 // pred_check
      %p141 = pneg %p140
    $region22: #{conv_relu.1} parent=5 // pred_check_branch
      %143 = sbr.rel (%p141) target = $region24
    $region23: #{conv_relu.1} parent=5 // pred_region
      // Predicated region
      $region25: #{conv_relu.1} parent=23 // pred_check
        %p144 = pneg %p43
      $region26: #{conv_relu.1} parent=23 // pred_check_branch
        %146 = sbr.rel (%p144) target = $region28
      $region27: #{conv_relu.1} parent=23 // pred_region
        %p147 = scmp.lt.s32.totalorder %s16, 1
        %s148 = scalar_select %p147, %s16, 1
        %p149 = scmp.lt.s32.totalorder %s17, 1
        %s150 = scalar_select %p149, %s17, 1
        %s151 = smul.addr %s150, 23
        %s152 = smul.addr %s148, 46
        %s153 = sadd.s32 %s151, %s152
        %s154 = smul.addr %s153, 4
        %s155 = scalar_lea.vmem %s0, %s154
      $region28: #{conv_relu.1} parent=23 // pred_fallthru
        _
    $region24: #{conv_relu.1} parent=5 // pred_fallthru
      _
    %p156 = scmp.le.s32.totalorder 1, %s9
    %p157 = scmp.lt.s32.totalorder %s9, 5
    %p158 = pnand %p156, %p157
    %p159 = pneg %p158
    // Predicated region
    $region29: #{conv_relu.1} parent=5 // pred_check
      _
    $region30: #{conv_relu.1} parent=5 // pred_check_branch
      %161 = sbr.rel (%p158) target = $region32
    $region31: #{conv_relu.1} parent=5 // pred_region
      %s162 = ssub.s32 %s9, 1
      %p163 = scmp.lt.s32.totalorder %s18, 1
      %s164 = scalar_select %p163, %s18, 1
      %p165 = scmp.lt.s32.totalorder %s19, 1
      %s166 = scalar_select %p165, %s19, 1
      %s167 = smul.addr %s166, 23
      %s168 = smul.addr %s164, 46
      %s169 = sadd.s32 %s167, %s168
      %s170 = smul.addr %s169, 4
      %s171 = scalar_lea.vmem %s0, %s170
      %p172 = pneg %p49
      %p173 = pneg %p46
      %p174 = pneg %p70
      %p175 = pneg %p67
      %p176 = pneg %p91
      %p177 = pneg %p88
      %p178 = pneg %p119
      %p179 = pneg %p116
      %p180 = scmp.lt.s32.totalorder %s18, 1
      %s181 = scalar_select %p180, %s18, 1
      %p182 = scmp.lt.s32.totalorder %s19, 1
      %s183 = scalar_select %p182, %s19, 1
      %s184 = smul.addr %s183, 18
      %s185 = smul.addr %s181, 36
      %s186 = sadd.s32 %s184, %s185
      %s187 = smul.addr %s186, 8
      %s188 = scalar_lea.vmem %s3, %s187
      %p189 = scmp.lt.s32.totalorder %s18, 1
      %s190 = scalar_select %p189, %s18, 1
      %p191 = scmp.lt.s32.totalorder %s19, 1
      %s192 = scalar_select %p191, %s19, 1
      %s193 = smul.addr %s192, 23
      %s194 = smul.addr %s190, 46
      %s195 = sadd.s32 %s193, %s194
      %s196 = smul.addr %s195, 4
      %s197 = scalar_lea.vmem %s0, %s196
      %p198 = scmp.lt.s32.totalorder %s18, 1
      %s199 = scalar_select %p198, %s18, 1
      %p200 = scmp.lt.s32.totalorder %s19, 1
      %s201 = scalar_select %p200, %s19, 1
      %s202 = smul.addr %s201, 18
      %s203 = smul.addr %s199, 36
      %s204 = sadd.s32 %s202, %s203
      %s205 = smul.addr %s204, 8
      %s206 = scalar_lea.vmem %s3, %s205
      %v208 = vld [vmem:[%s2] sm:$0x1]
      %v210 = vperm.slane %v208, 0
      %212 = vst [vmem:[#allocation2] sm:$0xff] %v210
      %213 = vst [vmem:[#allocation2 + $0x8] sm:$0xff] %v210
      %214 = vst [vmem:[#allocation2 + $0x10] sm:$0xff] %v210
      %215 = vst [vmem:[#allocation2 + $0x18] sm:$0xff] %v210
      %216 = vst [vmem:[#allocation2 + $0x20] sm:$0xff] %v210
      %217 = vst [vmem:[#allocation2 + $0x28] sm:$0xff] %v210
      %218 = vst [vmem:[#allocation2 + $0x30] sm:$0xff] %v210
      %219 = vst [vmem:[#allocation2 + $0x38] sm:$0xff] %v210
      %220 = vst [vmem:[#allocation2 + $0x40] sm:$0xff] %v210
      %221 = vst [vmem:[#allocation2 + $0x48] sm:$0xff] %v210
      %222 = vst [vmem:[#allocation2 + $0x50] sm:$0xff] %v210
      %223 = vst [vmem:[#allocation2 + $0x58] sm:$0xff] %v210
      %224 = vst [vmem:[#allocation2 + $0x60] sm:$0xff] %v210
      %225 = vst [vmem:[#allocation2 + $0x68] sm:$0xff] %v210
      %226 = vst [vmem:[#allocation2 + $0x70] sm:$0xff] %v210
      %227 = vst [vmem:[#allocation2 + $0x78] sm:$0xff] %v210
      %228 = vst [vmem:[#allocation2 + $0x80] sm:$0xff] %v210
      %229 = vst [vmem:[#allocation2 + $0x88] sm:$0xff] %v210
      %v230 = vld [vmem:[#allocation2] sm:$0xff]
      %v231 = vld [vmem:[#allocation2 + $0x8] sm:$0xff]
      %v232 = vld [vmem:[#allocation2 + $0x10] sm:$0xff]
      %v233 = vld [vmem:[#allocation2 + $0x18] sm:$0xff]
      %v234 = vld [vmem:[#allocation2 + $0x20] sm:$0xff]
      %v235 = vld [vmem:[#allocation2 + $0x28] sm:$0xff]
      %v236 = vld [vmem:[#allocation2 + $0x30] sm:$0xff]
      %v237 = vld [vmem:[#allocation2 + $0x38] sm:$0xff]
      %v238 = vld [vmem:[#allocation2 + $0x40] sm:$0xff]
      %v239 = vld [vmem:[#allocation2 + $0x48] sm:$0xff]
      %v240 = vld [vmem:[#allocation2 + $0x50] sm:$0xff]
      %v241 = vld [vmem:[#allocation2 + $0x58] sm:$0xff]
      %v242 = vld [vmem:[#allocation2 + $0x60] sm:$0xff]
      %v243 = vld [vmem:[#allocation2 + $0x68] sm:$0xff]
      %v244 = vld [vmem:[#allocation2 + $0x70] sm:$0xff]
      %v245 = vld [vmem:[#allocation2 + $0x78] sm:$0xff]
      %v246 = vld [vmem:[#allocation2 + $0x80] sm:$0xff]
      %v247 = vld [vmem:[#allocation2 + $0x88] sm:$0xff]
      %v248 = vld [vmem:[%s197] sm:$0xf]
      %v249 = vld [vmem:[%s197 + $0x4] sm:$0xf]
      %v250 = vld [vmem:[%s197 + $0x8] sm:$0xf]
      %v251 = vld [vmem:[%s197 + $0xc] sm:$0xf]
      %v252 = vld [vmem:[%s197 + $0x10] sm:$0xf]
      %v253 = vld [vmem:[%s197 + $0x14] sm:$0xf]
      %v254 = vld [vmem:[%s197 + $0x18] sm:$0xf]
      %v255 = vld [vmem:[%s197 + $0x1c] sm:$0xf]
      %v256 = vld [vmem:[%s197 + $0x20] sm:$0xf]
      %v257 = vld [vmem:[%s197 + $0x24] sm:$0xf]
      %v258 = vld [vmem:[%s197 + $0x28] sm:$0xf]
      %v259 = vld [vmem:[%s197 + $0x2c] sm:$0xf]
      %v260 = vld [vmem:[%s197 + $0x30] sm:$0xf]
      %v261 = vld [vmem:[%s197 + $0x34] sm:$0xf]
      %v262 = vld [vmem:[%s197 + $0x38] sm:$0xf]
      %v263 = vld [vmem:[%s197 + $0x3c] sm:$0xf]
      %v264 = vld [vmem:[%s197 + $0x40] sm:$0xf]
      %v265 = vld [vmem:[%s197 + $0x44] sm:$0xf]
      %v266 = vld [vmem:[%s1] sm:$0x3]
      %v285 = vunpack.c.l.b16 %v248
      %v286 = vunpack.c.l.b16 %v249
      %v287 = vunpack.c.l.b16 %v250
      %v288 = vunpack.c.l.b16 %v251
      %v289 = vunpack.c.l.b16 %v252
      %v290 = vunpack.c.l.b16 %v253
      %v291 = vunpack.c.l.b16 %v254
      %v292 = vunpack.c.l.b16 %v255
      %v293 = vunpack.c.l.b16 %v256
      %v294 = vunpack.c.l.b16 %v257
      %v295 = vunpack.c.l.b16 %v258
      %v296 = vunpack.c.l.b16 %v259
      %v297 = vunpack.c.l.b16 %v260
      %v298 = vunpack.c.l.b16 %v261
      %v299 = vunpack.c.l.b16 %v262
      %v300 = vunpack.c.l.b16 %v263
      %v301 = vunpack.c.l.b16 %v264
      %v302 = vunpack.c.l.b16 %v265
      %v303 = vpack.c.b16 %v286, %v285
      %v304 = vpack.c.b16 %v288, %v287
      %v305 = vpack.c.b16 %v290, %v289
      %v306 = vpack.c.b16 %v292, %v291
      %v307 = vpack.c.b16 %v294, %v293
      %v308 = vpack.c.b16 %v296, %v295
      %v309 = vpack.c.b16 %v298, %v297
      %v310 = vpack.c.b16 %v300, %v299
      %v311 = vpack.c.b16 %v302, %v301
      %vm312 = vcmask 31744
      %v314 = vsel %vm312, %v303, 0
      %v317 = vsel %vm312, %v304, 0
      %v320 = vsel %vm312, %v305, 0
      %v323 = vsel %vm312, %v306, 0
      %v326 = vsel %vm312, %v307, 0
      %v329 = vsel %vm312, %v308, 0
      %v332 = vsel %vm312, %v309, 0
      %v335 = vsel %vm312, %v310, 0
      %v338 = vsel %vm312, %v311, 0
      %vm340 = vcmask 1041408
      %v342 = vsel %vm340, %v266, 0
      %344 = vmatpush.bf16.msra.mxu0 0
      %345 = vmatpush.bf16.msra.mxu0 0
      %346 = vmatpush.bf16.msra.mxu0 0
      %347 = vmatpush.bf16.msra.mxu0 0
      %348 = vmatpush.bf16.msra.mxu0 0
      %349 = vmatpush.bf16.msra.mxu0 0
      %350 = vmatpush.bf16.msra.mxu0 0
      %351 = vmatpush.bf16.msra.mxu0 %v342
      %352 = vmatmul.bf16.gmra.mxu0 %v314
      %v353 = vpop.f32.mrf.mxu0
      %v354 = vadd.f32 0.0, %v353
      %v355 = vpop.f32.mrf.mxu0
      %v356 = vadd.f32 0.0, %v355
      %357 = vmatmul.bf16.gmra.mxu0 %v317
      %v358 = vpop.f32.mrf.mxu0
      %v359 = vadd.f32 0.0, %v358
      %v360 = vpop.f32.mrf.mxu0
      %v361 = vadd.f32 0.0, %v360
      %362 = vmatmul.bf16.gmra.mxu0 %v320
      %v363 = vpop.f32.mrf.mxu0
      %v364 = vadd.f32 0.0, %v363
      %v365 = vpop.f32.mrf.mxu0
      %v366 = vadd.f32 0.0, %v365
      %367 = vmatmul.bf16.gmra.mxu0 %v323
      %v368 = vpop.f32.mrf.mxu0
      %v369 = vadd.f32 0.0, %v368
      %v370 = vpop.f32.mrf.mxu0
      %v371 = vadd.f32 0.0, %v370
      %372 = vmatmul.bf16.gmra.mxu0 %v326
      %v373 = vpop.f32.mrf.mxu0
      %v374 = vadd.f32 0.0, %v373
      %v375 = vpop.f32.mrf.mxu0
      %v376 = vadd.f32 0.0, %v375
      %377 = vmatmul.bf16.gmra.mxu0 %v329
      %v378 = vpop.f32.mrf.mxu0
      %v379 = vadd.f32 0.0, %v378
      %v380 = vpop.f32.mrf.mxu0
      %v381 = vadd.f32 0.0, %v380
      %382 = vmatmul.bf16.gmra.mxu0 %v332
      %v383 = vpop.f32.mrf.mxu0
      %v384 = vadd.f32 0.0, %v383
      %v385 = vpop.f32.mrf.mxu0
      %v386 = vadd.f32 0.0, %v385
      %387 = vmatmul.bf16.gmra.mxu0 %v335
      %v388 = vpop.f32.mrf.mxu0
      %v389 = vadd.f32 0.0, %v388
      %v390 = vpop.f32.mrf.mxu0
      %v391 = vadd.f32 0.0, %v390
      %392 = vmatmul.bf16.gmra.mxu0 %v338
      %v393 = vpop.f32.mrf.mxu0
      %v394 = vadd.f32 0.0, %v393
      %v395 = vpop.f32.mrf.mxu0
      %v396 = vadd.f32 0.0, %v395
      %397 = vdwg.mxu0
      %v398 = vadd.f32 %v230, %v354
      %v399 = vadd.f32 %v231, %v356
      %v400 = vadd.f32 %v232, %v359
      %v401 = vadd.f32 %v233, %v361
      %v402 = vadd.f32 %v234, %v364
      %v403 = vadd.f32 %v235, %v366
      %v404 = vadd.f32 %v236, %v369
      %v405 = vadd.f32 %v237, %v371
      %v406 = vadd.f32 %v238, %v374
      %v407 = vadd.f32 %v239, %v376
      %v408 = vadd.f32 %v240, %v379
      %v409 = vadd.f32 %v241, %v381
      %v410 = vadd.f32 %v242, %v384
      %v411 = vadd.f32 %v243, %v386
      %v412 = vadd.f32 %v244, %v389
      %v413 = vadd.f32 %v245, %v391
      %v414 = vadd.f32 %v246, %v394
      %v415 = vadd.f32 %v247, %v396
      %416 = vst [vmem:[#allocation2] sm:$0xff] %v398
      %417 = vst [vmem:[#allocation2 + $0x8] sm:$0xff] %v399
      %418 = vst [vmem:[#allocation2 + $0x10] sm:$0xff] %v400
      %419 = vst [vmem:[#allocation2 + $0x18] sm:$0xff] %v401
      %420 = vst [vmem:[#allocation2 + $0x20] sm:$0xff] %v402
      %421 = vst [vmem:[#allocation2 + $0x28] sm:$0xff] %v403
      %422 = vst [vmem:[#allocation2 + $0x30] sm:$0xff] %v404
      %423 = vst [vmem:[#allocation2 + $0x38] sm:$0xff] %v405
      %424 = vst [vmem:[#allocation2 + $0x40] sm:$0xff] %v406
      %425 = vst [vmem:[#allocation2 + $0x48] sm:$0xff] %v407
      %426 = vst [vmem:[#allocation2 + $0x50] sm:$0xff] %v408
      %427 = vst [vmem:[#allocation2 + $0x58] sm:$0xff] %v409
      %428 = vst [vmem:[#allocation2 + $0x60] sm:$0xff] %v410
      %429 = vst [vmem:[#allocation2 + $0x68] sm:$0xff] %v411
      %430 = vst [vmem:[#allocation2 + $0x70] sm:$0xff] %v412
      %431 = vst [vmem:[#allocation2 + $0x78] sm:$0xff] %v413
      %432 = vst [vmem:[#allocation2 + $0x80] sm:$0xff] %v414
      %433 = vst [vmem:[#allocation2 + $0x88] sm:$0xff] %v415
      %v434 = vld [vmem:[#allocation2] sm:$0xff]
      %v435 = vld [vmem:[#allocation2 + $0x8] sm:$0xff]
      %v436 = vld [vmem:[#allocation2 + $0x10] sm:$0xff]
      %v437 = vld [vmem:[#allocation2 + $0x18] sm:$0xff]
      %v438 = vld [vmem:[#allocation2 + $0x20] sm:$0xff]
      %v439 = vld [vmem:[#allocation2 + $0x28] sm:$0xff]
      %v440 = vld [vmem:[#allocation2 + $0x30] sm:$0xff]
      %v441 = vld [vmem:[#allocation2 + $0x38] sm:$0xff]
      %v442 = vld [vmem:[#allocation2 + $0x40] sm:$0xff]
      %v443 = vld [vmem:[#allocation2 + $0x48] sm:$0xff]
      %v444 = vld [vmem:[#allocation2 + $0x50] sm:$0xff]
      %v445 = vld [vmem:[#allocation2 + $0x58] sm:$0xff]
      %v446 = vld [vmem:[#allocation2 + $0x60] sm:$0xff]
      %v447 = vld [vmem:[#allocation2 + $0x68] sm:$0xff]
      %v448 = vld [vmem:[#allocation2 + $0x70] sm:$0xff]
      %v449 = vld [vmem:[#allocation2 + $0x78] sm:$0xff]
      %v450 = vld [vmem:[#allocation2 + $0x80] sm:$0xff]
      %v451 = vld [vmem:[#allocation2 + $0x88] sm:$0xff]
      %v452 = vld [vmem:[%s197] sm:$0xf]
      %v453 = vld [vmem:[%s197 + $0x4] sm:$0xf]
      %v454 = vld [vmem:[%s197 + $0x8] sm:$0xf]
      %v455 = vld [vmem:[%s197 + $0xc] sm:$0xf]
      %v456 = vld [vmem:[%s197 + $0x10] sm:$0xf]
      %v457 = vld [vmem:[%s197 + $0x14] sm:$0xf]
      %v458 = vld [vmem:[%s197 + $0x18] sm:$0xf]
      %v459 = vld [vmem:[%s197 + $0x1c] sm:$0xf]
      %v460 = vld [vmem:[%s197 + $0x20] sm:$0xf]
      %v461 = vld [vmem:[%s197 + $0x24] sm:$0xf]
      %v462 = vld [vmem:[%s197 + $0x28] sm:$0xf]
      %v463 = vld [vmem:[%s197 + $0x2c] sm:$0xf]
      %v464 = vld [vmem:[%s197 + $0x30] sm:$0xf]
      %v465 = vld [vmem:[%s197 + $0x34] sm:$0xf]
      %v466 = vld [vmem:[%s197 + $0x38] sm:$0xf]
      %v467 = vld [vmem:[%s197 + $0x3c] sm:$0xf]
      %v468 = vld [vmem:[%s197 + $0x40] sm:$0xf]
      %v469 = vld [vmem:[%s197 + $0x44] sm:$0xf]
      %v470 = vld [vmem:[%s197 + $0x48] sm:$0x1]
      %s471 = scalar_lea.vmem %s1, 2
      %v472 = vld [vmem:[%s471] sm:$0x3]
      %v492 = vunpack.c.l.b16 %v452
      %v493 = vunpack.c.l.b16 %v453
      %v494 = vunpack.c.l.b16 %v454
      %v495 = vunpack.c.l.b16 %v455
      %v496 = vunpack.c.l.b16 %v456
      %v497 = vunpack.c.l.b16 %v457
      %v498 = vunpack.c.l.b16 %v458
      %v499 = vunpack.c.l.b16 %v459
      %v500 = vunpack.c.l.b16 %v460
      %v501 = vunpack.c.l.b16 %v461
      %v502 = vunpack.c.l.b16 %v462
      %v503 = vunpack.c.l.b16 %v463
      %v504 = vunpack.c.l.b16 %v464
      %v505 = vunpack.c.l.b16 %v465
      %v506 = vunpack.c.l.b16 %v466
      %v507 = vunpack.c.l.b16 %v467
      %v508 = vunpack.c.l.b16 %v468
      %v509 = vunpack.c.l.b16 %v469
      %v510 = vunpack.c.l.b16 %v470
      %v511 = vpack.c.b16 %v493, %v492
      %v512 = vpack.c.b16 %v495, %v494
      %v513 = vpack.c.b16 %v497, %v496
      %v514 = vpack.c.b16 %v499, %v498
      %v515 = vpack.c.b16 %v501, %v500
      %v516 = vpack.c.b16 %v503, %v502
      %v517 = vpack.c.b16 %v505, %v504
      %v518 = vpack.c.b16 %v507, %v506
      %v519 = vpack.c.b16 %v509, %v508
      %v520 = vpack.c.b16 %v510, %v510
      %vm521 = vsmask.f32 7424
      %v523 = vshrl.u32 %v511, 16
      %v525 = vshll.u32 %v511, 16
      %v527 = vrot.slane %v525, 1
      %v528 = vor.u32 %v523, %v527
      %v530 = vshll.u32 %v512, 16
      %v532 = vrot.slane %v530, 1
      %v533 = vsel %vm521, %v528, %v532
      %v534 = vshrl.u32 %v512, 16
      %v536 = vor.u32 %v534, %v532
      %v538 = vshll.u32 %v513, 16
      %v540 = vrot.slane %v538, 1
      %v541 = vsel %vm521, %v536, %v540
      %v542 = vshrl.u32 %v513, 16
      %v544 = vor.u32 %v542, %v540
      %v546 = vshll.u32 %v514, 16
      %v548 = vrot.slane %v546, 1
      %v549 = vsel %vm521, %v544, %v548
      %v550 = vshrl.u32 %v514, 16
      %v552 = vor.u32 %v550, %v548
      %v554 = vshll.u32 %v515, 16
      %v556 = vrot.slane %v554, 1
      %v557 = vsel %vm521, %v552, %v556
      %v558 = vshrl.u32 %v515, 16
      %v560 = vor.u32 %v558, %v556
      %v562 = vshll.u32 %v516, 16
      %v564 = vrot.slane %v562, 1
      %v565 = vsel %vm521, %v560, %v564
      %v566 = vshrl.u32 %v516, 16
      %v568 = vor.u32 %v566, %v564
      %v570 = vshll.u32 %v517, 16
      %v572 = vrot.slane %v570, 1
      %v573 = vsel %vm521, %v568, %v572
      %v574 = vshrl.u32 %v517, 16
      %v576 = vor.u32 %v574, %v572
      %v578 = vshll.u32 %v518, 16
      %v580 = vrot.slane %v578, 1
      %v581 = vsel %vm521, %v576, %v580
      %v582 = vshrl.u32 %v518, 16
      %v584 = vor.u32 %v582, %v580
      %v586 = vshll.u32 %v519, 16
      %v588 = vrot.slane %v586, 1
      %v589 = vsel %vm521, %v584, %v588
      %v590 = vshrl.u32 %v519, 16
      %v592 = vor.u32 %v590, %v588
      %v594 = vshll.u32 %v520, 16
      %v596 = vrot.slane %v594, 1
      %v597 = vsel %vm521, %v592, %v596
      %v599 = vsel %vm312, %v533, 0
      %v602 = vsel %vm312, %v541, 0
      %v605 = vsel %vm312, %v549, 0
      %v608 = vsel %vm312, %v557, 0
      %v611 = vsel %vm312, %v565, 0
      %v614 = vsel %vm312, %v573, 0
      %v617 = vsel %vm312, %v581, 0
      %v620 = vsel %vm312, %v589, 0
      %v623 = vsel %vm312, %v597, 0
      %v626 = vsel %vm340, %v472, 0
      %628 = vmatpush.bf16.msra.mxu0 0
      %629 = vmatpush.bf16.msra.mxu0 0
      %630 = vmatpush.bf16.msra.mxu0 0
      %631 = vmatpush.bf16.msra.mxu0 0
      %632 = vmatpush.bf16.msra.mxu0 0
      %633 = vmatpush.bf16.msra.mxu0 0
      %634 = vmatpush.bf16.msra.mxu0 0
      %635 = vmatpush.bf16.msra.mxu0 %v626
      %636 = vmatmul.bf16.gmra.mxu0 %v599
      %v637 = vpop.f32.mrf.mxu0
      %v638 = vadd.f32 0.0, %v637
      %v639 = vpop.f32.mrf.mxu0
      %v640 = vadd.f32 0.0, %v639
      %641 = vmatmul.bf16.gmra.mxu0 %v602
      %v642 = vpop.f32.mrf.mxu0
      %v643 = vadd.f32 0.0, %v642
      %v644 = vpop.f32.mrf.mxu0
      %v645 = vadd.f32 0.0, %v644
      %646 = vmatmul.bf16.gmra.mxu0 %v605
      %v647 = vpop.f32.mrf.mxu0
      %v648 = vadd.f32 0.0, %v647
      %v649 = vpop.f32.mrf.mxu0
      %v650 = vadd.f32 0.0, %v649
      %651 = vmatmul.bf16.gmra.mxu0 %v608
      %v652 = vpop.f32.mrf.mxu0
      %v653 = vadd.f32 0.0, %v652
      %v654 = vpop.f32.mrf.mxu0
      %v655 = vadd.f32 0.0, %v654
      %656 = vmatmul.bf16.gmra.mxu0 %v611
      %v657 = vpop.f32.mrf.mxu0
      %v658 = vadd.f32 0.0, %v657
      %v659 = vpop.f32.mrf.mxu0
      %v660 = vadd.f32 0.0, %v659
      %661 = vmatmul.bf16.gmra.mxu0 %v614
      %v662 = vpop.f32.mrf.mxu0
      %v663 = vadd.f32 0.0, %v662
      %v664 = vpop.f32.mrf.mxu0
      %v665 = vadd.f32 0.0, %v664
      %666 = vmatmul.bf16.gmra.mxu0 %v617
      %v667 = vpop.f32.mrf.mxu0
      %v668 = vadd.f32 0.0, %v667
      %v669 = vpop.f32.mrf.mxu0
      %v670 = vadd.f32 0.0, %v669
      %671 = vmatmul.bf16.gmra.mxu0 %v620
      %v672 = vpop.f32.mrf.mxu0
      %v673 = vadd.f32 0.0, %v672
      %v674 = vpop.f32.mrf.mxu0
      %v675 = vadd.f32 0.0, %v674
      %676 = vmatmul.bf16.gmra.mxu0 %v623
      %v677 = vpop.f32.mrf.mxu0
      %v678 = vadd.f32 0.0, %v677
      %v679 = vpop.f32.mrf.mxu0
      %v680 = vadd.f32 0.0, %v679
      %681 = vdwg.mxu0
      %v682 = vadd.f32 %v434, %v638
      %v683 = vadd.f32 %v435, %v640
      %v684 = vadd.f32 %v436, %v643
      %v685 = vadd.f32 %v437, %v645
      %v686 = vadd.f32 %v438, %v648
      %v687 = vadd.f32 %v439, %v650
      %v688 = vadd.f32 %v440, %v653
      %v689 = vadd.f32 %v441, %v655
      %v690 = vadd.f32 %v442, %v658
      %v691 = vadd.f32 %v443, %v660
      %v692 = vadd.f32 %v444, %v663
      %v693 = vadd.f32 %v445, %v665
      %v694 = vadd.f32 %v446, %v668
      %v695 = vadd.f32 %v447, %v670
      %v696 = vadd.f32 %v448, %v673
      %v697 = vadd.f32 %v449, %v675
      %v698 = vadd.f32 %v450, %v678
      %v699 = vadd.f32 %v451, %v680
      %700 = vst [vmem:[#allocation2] sm:$0xff] %v682
      %701 = vst [vmem:[#allocation2 + $0x8] sm:$0xff] %v683
      %702 = vst [vmem:[#allocation2 + $0x10] sm:$0xff] %v684
      %703 = vst [vmem:[#allocation2 + $0x18] sm:$0xff] %v685
      %704 = vst [vmem:[#allocation2 + $0x20] sm:$0xff] %v686
      %705 = vst [vmem:[#allocation2 + $0x28] sm:$0xff] %v687
      %706 = vst [vmem:[#allocation2 + $0x30] sm:$0xff] %v688
      %707 = vst [vmem:[#allocation2 + $0x38] sm:$0xff] %v689
      %708 = vst [vmem:[#allocation2 + $0x40] sm:$0xff] %v690
      %709 = vst [vmem:[#allocation2 + $0x48] sm:$0xff] %v691
      %710 = vst [vmem:[#allocation2 + $0x50] sm:$0xff] %v692
      %711 = vst [vmem:[#allocation2 + $0x58] sm:$0xff] %v693
      %712 = vst [vmem:[#allocation2 + $0x60] sm:$0xff] %v694
      %713 = vst [vmem:[#allocation2 + $0x68] sm:$0xff] %v695
      %714 = vst [vmem:[#allocation2 + $0x70] sm:$0xff] %v696
      %715 = vst [vmem:[#allocation2 + $0x78] sm:$0xff] %v697
      %716 = vst [vmem:[#allocation2 + $0x80] sm:$0xff] %v698
      %717 = vst [vmem:[#allocation2 + $0x88] sm:$0xff] %v699
      %v718 = vld [vmem:[#allocation2] sm:$0xff]
      %v719 = vld [vmem:[#allocation2 + $0x8] sm:$0xff]
      %v720 = vld [vmem:[#allocation2 + $0x10] sm:$0xff]
      %v721 = vld [vmem:[#allocation2 + $0x18] sm:$0xff]
      %v722 = vld [vmem:[#allocation2 + $0x20] sm:$0xff]
      %v723 = vld [vmem:[#allocation2 + $0x28] sm:$0xff]
      %v724 = vld [vmem:[#allocation2 + $0x30] sm:$0xff]
      %v725 = vld [vmem:[#allocation2 + $0x38] sm:$0xff]
      %v726 = vld [vmem:[#allocation2 + $0x40] sm:$0xff]
      %v727 = vld [vmem:[#allocation2 + $0x48] sm:$0xff]
      %v728 = vld [vmem:[#allocation2 + $0x50] sm:$0xff]
      %v729 = vld [vmem:[#allocation2 + $0x58] sm:$0xff]
      %v730 = vld [vmem:[#allocation2 + $0x60] sm:$0xff]
      %v731 = vld [vmem:[#allocation2 + $0x68] sm:$0xff]
      %v732 = vld [vmem:[#allocation2 + $0x70] sm:$0xff]
      %v733 = vld [vmem:[#allocation2 + $0x78] sm:$0xff]
      %v734 = vld [vmem:[#allocation2 + $0x80] sm:$0xff]
      %v735 = vld [vmem:[#allocation2 + $0x88] sm:$0xff]
      %v736 = vld [vmem:[%s197] sm:$0xe]
      %v737 = vld [vmem:[%s197 + $0x4] sm:$0xf]
      %v738 = vld [vmem:[%s197 + $0x8] sm:$0xf]
      %v739 = vld [vmem:[%s197 + $0xc] sm:$0xf]
      %v740 = vld [vmem:[%s197 + $0x10] sm:$0xf]
      %v741 = vld [vmem:[%s197 + $0x14] sm:$0xf]
      %v742 = vld [vmem:[%s197 + $0x18] sm:$0xf]
      %v743 = vld [vmem:[%s197 + $0x1c] sm:$0xf]
      %v744 = vld [vmem:[%s197 + $0x20] sm:$0xf]
      %v745 = vld [vmem:[%s197 + $0x24] sm:$0xf]
      %v746 = vld [vmem:[%s197 + $0x28] sm:$0xf]
      %v747 = vld [vmem:[%s197 + $0x2c] sm:$0xf]
      %v748 = vld [vmem:[%s197 + $0x30] sm:$0xf]
      %v749 = vld [vmem:[%s197 + $0x34] sm:$0xf]
      %v750 = vld [vmem:[%s197 + $0x38] sm:$0xf]
      %v751 = vld [vmem:[%s197 + $0x3c] sm:$0xf]
      %v752 = vld [vmem:[%s197 + $0x40] sm:$0xf]
      %v753 = vld [vmem:[%s197 + $0x44] sm:$0xf]
      %v754 = vld [vmem:[%s197 + $0x48] sm:$0x1]
      %s755 = scalar_lea.vmem %s1, 4
      %v756 = vld [vmem:[%s755] sm:$0x3]
      %v776 = vunpack.c.l.b16 %v736
      %v777 = vunpack.c.l.b16 %v737
      %v778 = vunpack.c.l.b16 %v738
      %v779 = vunpack.c.l.b16 %v739
      %v780 = vunpack.c.l.b16 %v740
      %v781 = vunpack.c.l.b16 %v741
      %v782 = vunpack.c.l.b16 %v742
      %v783 = vunpack.c.l.b16 %v743
      %v784 = vunpack.c.l.b16 %v744
      %v785 = vunpack.c.l.b16 %v745
      %v786 = vunpack.c.l.b16 %v746
      %v787 = vunpack.c.l.b16 %v747
      %v788 = vunpack.c.l.b16 %v748
      %v789 = vunpack.c.l.b16 %v749
      %v790 = vunpack.c.l.b16 %v750
      %v791 = vunpack.c.l.b16 %v751
      %v792 = vunpack.c.l.b16 %v752
      %v793 = vunpack.c.l.b16 %v753
      %v794 = vunpack.c.l.b16 %v754
      %v795 = vpack.c.b16 %v777, %v776
      %v796 = vpack.c.b16 %v779, %v778
      %v797 = vpack.c.b16 %v781, %v780
      %v798 = vpack.c.b16 %v783, %v782
      %v799 = vpack.c.b16 %v785, %v784
      %v800 = vpack.c.b16 %v787, %v786
      %v801 = vpack.c.b16 %v789, %v788
      %v802 = vpack.c.b16 %v791, %v790
      %v803 = vpack.c.b16 %v793, %v792
      %v804 = vpack.c.b16 %v794, %v794
      %vm805 = vcmask 1046528
      %v806 = vrot.slane %v795, 1
      %v807 = vrot.slane %v796, 1
      %v808 = vsel %vm805, %v806, %v807
      %v809 = vrot.slane %v797, 1
      %v810 = vsel %vm805, %v807, %v809
      %v811 = vrot.slane %v798, 1
      %v812 = vsel %vm805, %v809, %v811
      %v813 = vrot.slane %v799, 1
      %v814 = vsel %vm805, %v811, %v813
      %v815 = vrot.slane %v800, 1
      %v816 = vsel %vm805, %v813, %v815
      %v817 = vrot.slane %v801, 1
      %v818 = vsel %vm805, %v815, %v817
      %v819 = vrot.slane %v802, 1
      %v820 = vsel %vm805, %v817, %v819
      %v821 = vrot.slane %v803, 1
      %v822 = vsel %vm805, %v819, %v821
      %v823 = vrot.slane %v804, 1
      %v824 = vsel %vm805, %v821, %v823
      %v826 = vsel %vm312, %v808, 0
      %v829 = vsel %vm312, %v810, 0
      %v832 = vsel %vm312, %v812, 0
      %v835 = vsel %vm312, %v814, 0
      %v838 = vsel %vm312, %v816, 0
      %v841 = vsel %vm312, %v818, 0
      %v844 = vsel %vm312, %v820, 0
      %v847 = vsel %vm312, %v822, 0
      %v850 = vsel %vm312, %v824, 0
      %v853 = vsel %vm340, %v756, 0
      %855 = vmatpush.bf16.msra.mxu0 0
      %856 = vmatpush.bf16.msra.mxu0 0
      %857 = vmatpush.bf16.msra.mxu0 0
      %858 = vmatpush.bf16.msra.mxu0 0
      %859 = vmatpush.bf16.msra.mxu0 0
      %860 = vmatpush.bf16.msra.mxu0 0
      %861 = vmatpush.bf16.msra.mxu0 0
      %862 = vmatpush.bf16.msra.mxu0 %v853
      %863 = vmatmul.bf16.gmra.mxu0 %v826
      %v864 = vpop.f32.mrf.mxu0
      %v865 = vadd.f32 0.0, %v864
      %v866 = vpop.f32.mrf.mxu0
      %v867 = vadd.f32 0.0, %v866
      %868 = vmatmul.bf16.gmra.mxu0 %v829
      %v869 = vpop.f32.mrf.mxu0
      %v870 = vadd.f32 0.0, %v869
      %v871 = vpop.f32.mrf.mxu0
      %v872 = vadd.f32 0.0, %v871
      %873 = vmatmul.bf16.gmra.mxu0 %v832
      %v874 = vpop.f32.mrf.mxu0
      %v875 = vadd.f32 0.0, %v874
      %v876 = vpop.f32.mrf.mxu0
      %v877 = vadd.f32 0.0, %v876
      %878 = vmatmul.bf16.gmra.mxu0 %v835
      %v879 = vpop.f32.mrf.mxu0
      %v880 = vadd.f32 0.0, %v879
      %v881 = vpop.f32.mrf.mxu0
      %v882 = vadd.f32 0.0, %v881
      %883 = vmatmul.bf16.gmra.mxu0 %v838
      %v884 = vpop.f32.mrf.mxu0
      %v885 = vadd.f32 0.0, %v884
      %v886 = vpop.f32.mrf.mxu0
      %v887 = vadd.f32 0.0, %v886
      %888 = vmatmul.bf16.gmra.mxu0 %v841
      %v889 = vpop.f32.mrf.mxu0
      %v890 = vadd.f32 0.0, %v889
      %v891 = vpop.f32.mrf.mxu0
      %v892 = vadd.f32 0.0, %v891
      %893 = vmatmul.bf16.gmra.mxu0 %v844
      %v894 = vpop.f32.mrf.mxu0
      %v895 = vadd.f32 0.0, %v894
      %v896 = vpop.f32.mrf.mxu0
      %v897 = vadd.f32 0.0, %v896
      %898 = vmatmul.bf16.gmra.mxu0 %v847
      %v899 = vpop.f32.mrf.mxu0
      %v900 = vadd.f32 0.0, %v899
      %v901 = vpop.f32.mrf.mxu0
      %v902 = vadd.f32 0.0, %v901
      %903 = vmatmul.bf16.gmra.mxu0 %v850
      %v904 = vpop.f32.mrf.mxu0
      %v905 = vadd.f32 0.0, %v904
      %v906 = vpop.f32.mrf.mxu0
      %v907 = vadd.f32 0.0, %v906
      %908 = vdwg.mxu0
      %v909 = vadd.f32 %v718, %v865
      %v910 = vadd.f32 %v719, %v867
      %v911 = vadd.f32 %v720, %v870
      %v912 = vadd.f32 %v721, %v872
      %v913 = vadd.f32 %v722, %v875
      %v914 = vadd.f32 %v723, %v877
      %v915 = vadd.f32 %v724, %v880
      %v916 = vadd.f32 %v725, %v882
      %v917 = vadd.f32 %v726, %v885
      %v918 = vadd.f32 %v727, %v887
      %v919 = vadd.f32 %v728, %v890
      %v920 = vadd.f32 %v729, %v892
      %v921 = vadd.f32 %v730, %v895
      %v922 = vadd.f32 %v731, %v897
      %v923 = vadd.f32 %v732, %v900
      %v924 = vadd.f32 %v733, %v902
      %v925 = vadd.f32 %v734, %v905
      %v926 = vadd.f32 %v735, %v907
      %927 = vst [vmem:[#allocation2] sm:$0xff] %v909
      %928 = vst [vmem:[#allocation2 + $0x8] sm:$0xff] %v910
      %929 = vst [vmem:[#allocation2 + $0x10] sm:$0xff] %v911
      %930 = vst [vmem:[#allocation2 + $0x18] sm:$0xff] %v912
      %931 = vst [vmem:[#allocation2 + $0x20] sm:$0xff] %v913
      %932 = vst [vmem:[#allocation2 + $0x28] sm:$0xff] %v914
      %933 = vst [vmem:[#allocation2 + $0x30] sm:$0xff] %v915
      %934 = vst [vmem:[#allocation2 + $0x38] sm:$0xff] %v916
      %935 = vst [vmem:[#allocation2 + $0x40] sm:$0xff] %v917
      %936 = vst [vmem:[#allocation2 + $0x48] sm:$0xff] %v918
      %937 = vst [vmem:[#allocation2 + $0x50] sm:$0xff] %v919
      %938 = vst [vmem:[#allocation2 + $0x58] sm:$0xff] %v920
      %939 = vst [vmem:[#allocation2 + $0x60] sm:$0xff] %v921
      %940 = vst [vmem:[#allocation2 + $0x68] sm:$0xff] %v922
      %941 = vst [vmem:[#allocation2 + $0x70] sm:$0xff] %v923
      %942 = vst [vmem:[#allocation2 + $0x78] sm:$0xff] %v924
      %943 = vst [vmem:[#allocation2 + $0x80] sm:$0xff] %v925
      %944 = vst [vmem:[#allocation2 + $0x88] sm:$0xff] %v926
      %v945 = vld [vmem:[#allocation2] sm:$0xff]
      %v946 = vld [vmem:[#allocation2 + $0x8] sm:$0xff]
      %v947 = vld [vmem:[#allocation2 + $0x10] sm:$0xff]
      %v948 = vld [vmem:[#allocation2 + $0x18] sm:$0xff]
      %v949 = vld [vmem:[#allocation2 + $0x20] sm:$0xff]
      %v950 = vld [vmem:[#allocation2 + $0x28] sm:$0xff]
      %v951 = vld [vmem:[#allocation2 + $0x30] sm:$0xff]
      %v952 = vld [vmem:[#allocation2 + $0x38] sm:$0xff]
      %v953 = vld [vmem:[#allocation2 + $0x40] sm:$0xff]
      %v954 = vld [vmem:[#allocation2 + $0x48] sm:$0xff]
      %v955 = vld [vmem:[#allocation2 + $0x50] sm:$0xff]
      %v956 = vld [vmem:[#allocation2 + $0x58] sm:$0xff]
      %v957 = vld [vmem:[#allocation2 + $0x60] sm:$0xff]
      %v958 = vld [vmem:[#allocation2 + $0x68] sm:$0xff]
      %v959 = vld [vmem:[#allocation2 + $0x70] sm:$0xff]
      %v960 = vld [vmem:[#allocation2 + $0x78] sm:$0xff]
      %v961 = vld [vmem:[#allocation2 + $0x80] sm:$0xff]
      %v962 = vld [vmem:[#allocation2 + $0x88] sm:$0xff]
      %v963 = vld [vmem:[%s197 + $0x8] sm:$0xe]
      %v964 = vld [vmem:[%s197 + $0xc] sm:$0xf]
      %v965 = vld [vmem:[%s197 + $0x10] sm:$0xf]
      %v966 = vld [vmem:[%s197 + $0x14] sm:$0xf]
      %v967 = vld [vmem:[%s197 + $0x18] sm:$0xf]
      %v968 = vld [vmem:[%s197 + $0x1c] sm:$0xf]
      %v969 = vld [vmem:[%s197 + $0x20] sm:$0xf]
      %v970 = vld [vmem:[%s197 + $0x24] sm:$0xf]
      %v971 = vld [vmem:[%s197 + $0x28] sm:$0xf]
      %v972 = vld [vmem:[%s197 + $0x2c] sm:$0xf]
      %v973 = vld [vmem:[%s197 + $0x30] sm:$0xf]
      %v974 = vld [vmem:[%s197 + $0x34] sm:$0xf]
      %v975 = vld [vmem:[%s197 + $0x38] sm:$0xf]
      %v976 = vld [vmem:[%s197 + $0x3c] sm:$0xf]
      %v977 = vld [vmem:[%s197 + $0x40] sm:$0xf]
      %v978 = vld [vmem:[%s197 + $0x44] sm:$0xf]
      %v979 = vld [vmem:[%s197 + $0x48] sm:$0xf]
      %v980 = vld [vmem:[%s197 + $0x4c] sm:$0xf]
      %v981 = vld [vmem:[%s197 + $0x50] sm:$0x1]
      %s982 = scalar_lea.vmem %s1, 6
      %v983 = vld [vmem:[%s982] sm:$0x3]
      %v1003 = vunpack.c.l.b16 %v963
      %v1004 = vunpack.c.l.b16 %v964
      %v1005 = vunpack.c.l.b16 %v965
      %v1006 = vunpack.c.l.b16 %v966
      %v1007 = vunpack.c.l.b16 %v967
      %v1008 = vunpack.c.l.b16 %v968
      %v1009 = vunpack.c.l.b16 %v969
      %v1010 = vunpack.c.l.b16 %v970
      %v1011 = vunpack.c.l.b16 %v971
      %v1012 = vunpack.c.l.b16 %v972
      %v1013 = vunpack.c.l.b16 %v973
      %v1014 = vunpack.c.l.b16 %v974
      %v1015 = vunpack.c.l.b16 %v975
      %v1016 = vunpack.c.l.b16 %v976
      %v1017 = vunpack.c.l.b16 %v977
      %v1018 = vunpack.c.l.b16 %v978
      %v1019 = vunpack.c.l.b16 %v979
      %v1020 = vunpack.c.l.b16 %v980
      %v1021 = vunpack.c.l.b16 %v981
      %v1022 = vpack.c.b16 %v1004, %v1003
      %v1023 = vpack.c.b16 %v1006, %v1005
      %v1024 = vpack.c.b16 %v1008, %v1007
      %v1025 = vpack.c.b16 %v1010, %v1009
      %v1026 = vpack.c.b16 %v1012, %v1011
      %v1027 = vpack.c.b16 %v1014, %v1013
      %v1028 = vpack.c.b16 %v1016, %v1015
      %v1029 = vpack.c.b16 %v1018, %v1017
      %v1030 = vpack.c.b16 %v1020, %v1019
      %v1031 = vpack.c.b16 %v1021, %v1021
      %v1032 = vrot.slane %v1022, 1
      %v1033 = vrot.slane %v1023, 1
      %v1034 = vsel %vm805, %v1032, %v1033
      %v1035 = vrot.slane %v1024, 1
      %v1036 = vsel %vm805, %v1033, %v1035
      %v1037 = vrot.slane %v1025, 1
      %v1038 = vsel %vm805, %v1035, %v1037
      %v1039 = vrot.slane %v1026, 1
      %v1040 = vsel %vm805, %v1037, %v1039
      %v1041 = vrot.slane %v1027, 1
      %v1042 = vsel %vm805, %v1039, %v1041
      %v1043 = vrot.slane %v1028, 1
      %v1044 = vsel %vm805, %v1041, %v1043
      %v1045 = vrot.slane %v1029, 1
      %v1046 = vsel %vm805, %v1043, %v1045
      %v1047 = vrot.slane %v1030, 1
      %v1048 = vsel %vm805, %v1045, %v1047
      %v1049 = vrot.slane %v1031, 1
      %v1050 = vsel %vm805, %v1047, %v1049
      %v1052 = vsel %vm312, %v1034, 0
      %v1055 = vsel %vm312, %v1036, 0
      %v1058 = vsel %vm312, %v1038, 0
      %v1061 = vsel %vm312, %v1040, 0
      %v1064 = vsel %vm312, %v1042, 0
      %v1067 = vsel %vm312, %v1044, 0
      %v1070 = vsel %vm312, %v1046, 0
      %v1073 = vsel %vm312, %v1048, 0
      %v1076 = vsel %vm312, %v1050, 0
      %v1079 = vsel %vm340, %v983, 0
      %1081 = vmatpush.bf16.msra.mxu0 0
      %1082 = vmatpush.bf16.msra.mxu0 0
      %1083 = vmatpush.bf16.msra.mxu0 0
      %1084 = vmatpush.bf16.msra.mxu0 0
      %1085 = vmatpush.bf16.msra.mxu0 0
      %1086 = vmatpush.bf16.msra.mxu0 0
      %1087 = vmatpush.bf16.msra.mxu0 0
      %1088 = vmatpush.bf16.msra.mxu0 %v1079
      %1089 = vmatmul.bf16.gmra.mxu0 %v1052
      %v1090 = vpop.f32.mrf.mxu0
      %v1091 = vadd.f32 0.0, %v1090
      %v1092 = vpop.f32.mrf.mxu0
      %v1093 = vadd.f32 0.0, %v1092
      %1094 = vmatmul.bf16.gmra.mxu0 %v1055
      %v1095 = vpop.f32.mrf.mxu0
      %v1096 = vadd.f32 0.0, %v1095
      %v1097 = vpop.f32.mrf.mxu0
      %v1098 = vadd.f32 0.0, %v1097
      %1099 = vmatmul.bf16.gmra.mxu0 %v1058
      %v1100 = vpop.f32.mrf.mxu0
      %v1101 = vadd.f32 0.0, %v1100
      %v1102 = vpop.f32.mrf.mxu0
      %v1103 = vadd.f32 0.0, %v1102
      %1104 = vmatmul.bf16.gmra.mxu0 %v1061
      %v1105 = vpop.f32.mrf.mxu0
      %v1106 = vadd.f32 0.0, %v1105
      %v1107 = vpop.f32.mrf.mxu0
      %v1108 = vadd.f32 0.0, %v1107
      %1109 = vmatmul.bf16.gmra.mxu0 %v1064
      %v1110 = vpop.f32.mrf.mxu0
      %v1111 = vadd.f32 0.0, %v1110
      %v1112 = vpop.f32.mrf.mxu0
      %v1113 = vadd.f32 0.0, %v1112
      %1114 = vmatmul.bf16.gmra.mxu0 %v1067
      %v1115 = vpop.f32.mrf.mxu0
      %v1116 = vadd.f32 0.0, %v1115
      %v1117 = vpop.f32.mrf.mxu0
      %v1118 = vadd.f32 0.0, %v1117
      %1119 = vmatmul.bf16.gmra.mxu0 %v1070
      %v1120 = vpop.f32.mrf.mxu0
      %v1121 = vadd.f32 0.0, %v1120
      %v1122 = vpop.f32.mrf.mxu0
      %v1123 = vadd.f32 0.0, %v1122
      %1124 = vmatmul.bf16.gmra.mxu0 %v1073
      %v1125 = vpop.f32.mrf.mxu0
      %v1126 = vadd.f32 0.0, %v1125
      %v1127 = vpop.f32.mrf.mxu0
      %v1128 = vadd.f32 0.0, %v1127
      %1129 = vmatmul.bf16.gmra.mxu0 %v1076
      %v1130 = vpop.f32.mrf.mxu0
      %v1131 = vadd.f32 0.0, %v1130
      %v1132 = vpop.f32.mrf.mxu0
      %v1133 = vadd.f32 0.0, %v1132
      %1134 = vdwg.mxu0
      %v1135 = vadd.f32 %v945, %v1091
      %v1136 = vadd.f32 %v946, %v1093
      %v1137 = vadd.f32 %v947, %v1096
      %v1138 = vadd.f32 %v948, %v1098
      %v1139 = vadd.f32 %v949, %v1101
      %v1140 = vadd.f32 %v950, %v1103
      %v1141 = vadd.f32 %v951, %v1106
      %v1142 = vadd.f32 %v952, %v1108
      %v1143 = vadd.f32 %v953, %v1111
      %v1144 = vadd.f32 %v954, %v1113
      %v1145 = vadd.f32 %v955, %v1116
      %v1146 = vadd.f32 %v956, %v1118
      %v1147 = vadd.f32 %v957, %v1121
      %v1148 = vadd.f32 %v958, %v1123
      %v1149 = vadd.f32 %v959, %v1126
      %v1150 = vadd.f32 %v960, %v1128
      %v1151 = vadd.f32 %v961, %v1131
      %v1152 = vadd.f32 %v962, %v1133
      %1153 = vst [vmem:[#allocation2] sm:$0xff] %v1135
      %1154 = vst [vmem:[#allocation2 + $0x8] sm:$0xff] %v1136
      %1155 = vst [vmem:[#allocation2 + $0x10] sm:$0xff] %v1137
      %1156 = vst [vmem:[#allocation2 + $0x18] sm:$0xff] %v1138
      %1157 = vst [vmem:[#allocation2 + $0x20] sm:$0xff] %v1139
      %1158 = vst [vmem:[#allocation2 + $0x28] sm:$0xff] %v1140
      %1159 = vst [vmem:[#allocation2 + $0x30] sm:$0xff] %v1141
      %1160 = vst [vmem:[#allocation2 + $0x38] sm:$0xff] %v1142
      %1161 = vst [vmem:[#allocation2 + $0x40] sm:$0xff] %v1143
      %1162 = vst [vmem:[#allocation2 + $0x48] sm:$0xff] %v1144
      %1163 = vst [vmem:[#allocation2 + $0x50] sm:$0xff] %v1145
      %1164 = vst [vmem:[#allocation2 + $0x58] sm:$0xff] %v1146
      %1165 = vst [vmem:[#allocation2 + $0x60] sm:$0xff] %v1147
      %1166 = vst [vmem:[#allocation2 + $0x68] sm:$0xff] %v1148
      %1167 = vst [vmem:[#allocation2 + $0x70] sm:$0xff] %v1149
      %1168 = vst [vmem:[#allocation2 + $0x78] sm:$0xff] %v1150
      %1169 = vst [vmem:[#allocation2 + $0x80] sm:$0xff] %v1151
      %1170 = vst [vmem:[#allocation2 + $0x88] sm:$0xff] %v1152
      %v1171 = vld [vmem:[#allocation2] sm:$0xff]
      %v1172 = vld [vmem:[#allocation2 + $0x8] sm:$0xff]
      %v1173 = vld [vmem:[#allocation2 + $0x10] sm:$0xff]
      %v1174 = vld [vmem:[#allocation2 + $0x18] sm:$0xff]
      %v1175 = vld [vmem:[#allocation2 + $0x20] sm:$0xff]
      %v1176 = vld [vmem:[#allocation2 + $0x28] sm:$0xff]
      %v1177 = vld [vmem:[#allocation2 + $0x30] sm:$0xff]
      %v1178 = vld [vmem:[#allocation2 + $0x38] sm:$0xff]
      %v1179 = vld [vmem:[#allocation2 + $0x40] sm:$0xff]
      %v1180 = vld [vmem:[#allocation2 + $0x48] sm:$0xff]
      %v1181 = vld [vmem:[#allocation2 + $0x50] sm:$0xff]
      %v1182 = vld [vmem:[#allocation2 + $0x58] sm:$0xff]
      %v1183 = vld [vmem:[#allocation2 + $0x60] sm:$0xff]
      %v1184 = vld [vmem:[#allocation2 + $0x68] sm:$0xff]
      %v1185 = vld [vmem:[#allocation2 + $0x70] sm:$0xff]
      %v1186 = vld [vmem:[#allocation2 + $0x78] sm:$0xff]
      %v1187 = vld [vmem:[#allocation2 + $0x80] sm:$0xff]
      %v1188 = vld [vmem:[#allocation2 + $0x88] sm:$0xff]
      %v1189 = vld [vmem:[%s197 + $0x8] sm:$0xe]
      %v1190 = vld [vmem:[%s197 + $0xc] sm:$0xf]
      %v1191 = vld [vmem:[%s197 + $0x10] sm:$0xf]
      %v1192 = vld [vmem:[%s197 + $0x14] sm:$0xf]
      %v1193 = vld [vmem:[%s197 + $0x18] sm:$0xf]
      %v1194 = vld [vmem:[%s197 + $0x1c] sm:$0xf]
      %v1195 = vld [vmem:[%s197 + $0x20] sm:$0xf]
      %v1196 = vld [vmem:[%s197 + $0x24] sm:$0xf]
      %v1197 = vld [vmem:[%s197 + $0x28] sm:$0xf]
      %v1198 = vld [vmem:[%s197 + $0x2c] sm:$0xf]
      %v1199 = vld [vmem:[%s197 + $0x30] sm:$0xf]
      %v1200 = vld [vmem:[%s197 + $0x34] sm:$0xf]
      %v1201 = vld [vmem:[%s197 + $0x38] sm:$0xf]
      %v1202 = vld [vmem:[%s197 + $0x3c] sm:$0xf]
      %v1203 = vld [vmem:[%s197 + $0x40] sm:$0xf]
      %v1204 = vld [vmem:[%s197 + $0x44] sm:$0xf]
      %v1205 = vld [vmem:[%s197 + $0x48] sm:$0xf]
      %v1206 = vld [vmem:[%s197 + $0x4c] sm:$0xf]
      %v1207 = vld [vmem:[%s197 + $0x50] sm:$0x3]
      %s1208 = scalar_lea.vmem %s1, 8
      %v1209 = vld [vmem:[%s1208] sm:$0x3]
      %v1229 = vunpack.c.l.b16 %v1189
      %v1230 = vunpack.c.l.b16 %v1190
      %v1231 = vunpack.c.l.b16 %v1191
      %v1232 = vunpack.c.l.b16 %v1192
      %v1233 = vunpack.c.l.b16 %v1193
      %v1234 = vunpack.c.l.b16 %v1194
      %v1235 = vunpack.c.l.b16 %v1195
      %v1236 = vunpack.c.l.b16 %v1196
      %v1237 = vunpack.c.l.b16 %v1197
      %v1238 = vunpack.c.l.b16 %v1198
      %v1239 = vunpack.c.l.b16 %v1199
      %v1240 = vunpack.c.l.b16 %v1200
      %v1241 = vunpack.c.l.b16 %v1201
      %v1242 = vunpack.c.l.b16 %v1202
      %v1243 = vunpack.c.l.b16 %v1203
      %v1244 = vunpack.c.l.b16 %v1204
      %v1245 = vunpack.c.l.b16 %v1205
      %v1246 = vunpack.c.l.b16 %v1206
      %v1247 = vunpack.c.l.b16 %v1207
      %v1248 = vpack.c.b16 %v1230, %v1229
      %v1249 = vpack.c.b16 %v1232, %v1231
      %v1250 = vpack.c.b16 %v1234, %v1233
      %v1251 = vpack.c.b16 %v1236, %v1235
      %v1252 = vpack.c.b16 %v1238, %v1237
      %v1253 = vpack.c.b16 %v1240, %v1239
      %v1254 = vpack.c.b16 %v1242, %v1241
      %v1255 = vpack.c.b16 %v1244, %v1243
      %v1256 = vpack.c.b16 %v1246, %v1245
      %v1257 = vpack.c.b16 %v1247, %v1247
      %vm1258 = vsmask.f32 6400
      %v1260 = vshrl.u32 %v1248, 16
      %v1262 = vrot.slane %v1260, 1
      %v1263 = vshll.u32 %v1248, 16
      %v1265 = vrot.slane %v1263, 2
      %v1266 = vor.u32 %v1262, %v1265
      %v1268 = vshrl.u32 %v1249, 16
      %v1270 = vrot.slane %v1268, 1
      %v1271 = vshll.u32 %v1249, 16
      %v1273 = vrot.slane %v1271, 2
      %v1274 = vor.u32 %v1270, %v1273
      %v1275 = vsel %vm1258, %v1266, %v1274
      %v1277 = vshrl.u32 %v1250, 16
      %v1279 = vrot.slane %v1277, 1
      %v1280 = vshll.u32 %v1250, 16
      %v1282 = vrot.slane %v1280, 2
      %v1283 = vor.u32 %v1279, %v1282
      %v1284 = vsel %vm1258, %v1274, %v1283
      %v1286 = vshrl.u32 %v1251, 16
      %v1288 = vrot.slane %v1286, 1
      %v1289 = vshll.u32 %v1251, 16
      %v1291 = vrot.slane %v1289, 2
      %v1292 = vor.u32 %v1288, %v1291
      %v1293 = vsel %vm1258, %v1283, %v1292
      %v1295 = vshrl.u32 %v1252, 16
      %v1297 = vrot.slane %v1295, 1
      %v1298 = vshll.u32 %v1252, 16
      %v1300 = vrot.slane %v1298, 2
      %v1301 = vor.u32 %v1297, %v1300
      %v1302 = vsel %vm1258, %v1292, %v1301
      %v1304 = vshrl.u32 %v1253, 16
      %v1306 = vrot.slane %v1304, 1
      %v1307 = vshll.u32 %v1253, 16
      %v1309 = vrot.slane %v1307, 2
      %v1310 = vor.u32 %v1306, %v1309
      %v1311 = vsel %vm1258, %v1301, %v1310
      %v1313 = vshrl.u32 %v1254, 16
      %v1315 = vrot.slane %v1313, 1
      %v1316 = vshll.u32 %v1254, 16
      %v1318 = vrot.slane %v1316, 2
      %v1319 = vor.u32 %v1315, %v1318
      %v1320 = vsel %vm1258, %v1310, %v1319
      %v1322 = vshrl.u32 %v1255, 16
      %v1324 = vrot.slane %v1322, 1
      %v1325 = vshll.u32 %v1255, 16
      %v1327 = vrot.slane %v1325, 2
      %v1328 = vor.u32 %v1324, %v1327
      %v1329 = vsel %vm1258, %v1319, %v1328
      %v1331 = vshrl.u32 %v1256, 16
      %v1333 = vrot.slane %v1331, 1
      %v1334 = vshll.u32 %v1256, 16
      %v1336 = vrot.slane %v1334, 2
      %v1337 = vor.u32 %v1333, %v1336
      %v1338 = vsel %vm1258, %v1328, %v1337
      %v1340 = vshrl.u32 %v1257, 16
      %v1342 = vrot.slane %v1340, 1
      %v1343 = vshll.u32 %v1257, 16
      %v1345 = vrot.slane %v1343, 2
      %v1346 = vor.u32 %v1342, %v1345
      %v1347 = vsel %vm1258, %v1337, %v1346
      %v1349 = vsel %vm312, %v1275, 0
      %v1352 = vsel %vm312, %v1284, 0
      %v1355 = vsel %vm312, %v1293, 0
      %v1358 = vsel %vm312, %v1302, 0
      %v1361 = vsel %vm312, %v1311, 0
      %v1364 = vsel %vm312, %v1320, 0
      %v1367 = vsel %vm312, %v1329, 0
      %v1370 = vsel %vm312, %v1338, 0
      %v1373 = vsel %vm312, %v1347, 0
      %v1376 = vsel %vm340, %v1209, 0
      %1378 = vmatpush.bf16.msra.mxu0 0
      %1379 = vmatpush.bf16.msra.mxu0 0
      %1380 = vmatpush.bf16.msra.mxu0 0
      %1381 = vmatpush.bf16.msra.mxu0 0
      %1382 = vmatpush.bf16.msra.mxu0 0
      %1383 = vmatpush.bf16.msra.mxu0 0
      %1384 = vmatpush.bf16.msra.mxu0 0
      %1385 = vmatpush.bf16.msra.mxu0 %v1376
      %1386 = vmatmul.bf16.gmra.mxu0 %v1349
      %v1387 = vpop.f32.mrf.mxu0
      %v1388 = vadd.f32 0.0, %v1387
      %v1389 = vpop.f32.mrf.mxu0
      %v1390 = vadd.f32 0.0, %v1389
      %1391 = vmatmul.bf16.gmra.mxu0 %v1352
      %v1392 = vpop.f32.mrf.mxu0
      %v1393 = vadd.f32 0.0, %v1392
      %v1394 = vpop.f32.mrf.mxu0
      %v1395 = vadd.f32 0.0, %v1394
      %1396 = vmatmul.bf16.gmra.mxu0 %v1355
      %v1397 = vpop.f32.mrf.mxu0
      %v1398 = vadd.f32 0.0, %v1397
      %v1399 = vpop.f32.mrf.mxu0
      %v1400 = vadd.f32 0.0, %v1399
      %1401 = vmatmul.bf16.gmra.mxu0 %v1358
      %v1402 = vpop.f32.mrf.mxu0
      %v1403 = vadd.f32 0.0, %v1402
      %v1404 = vpop.f32.mrf.mxu0
      %v1405 = vadd.f32 0.0, %v1404
      %1406 = vmatmul.bf16.gmra.mxu0 %v1361
      %v1407 = vpop.f32.mrf.mxu0
      %v1408 = vadd.f32 0.0, %v1407
      %v1409 = vpop.f32.mrf.mxu0
      %v1410 = vadd.f32 0.0, %v1409
      %1411 = vmatmul.bf16.gmra.mxu0 %v1364
      %v1412 = vpop.f32.mrf.mxu0
      %v1413 = vadd.f32 0.0, %v1412
      %v1414 = vpop.f32.mrf.mxu0
      %v1415 = vadd.f32 0.0, %v1414
      %1416 = vmatmul.bf16.gmra.mxu0 %v1367
      %v1417 = vpop.f32.mrf.mxu0
      %v1418 = vadd.f32 0.0, %v1417
      %v1419 = vpop.f32.mrf.mxu0
      %v1420 = vadd.f32 0.0, %v1419
      %1421 = vmatmul.bf16.gmra.mxu0 %v1370
      %v1422 = vpop.f32.mrf.mxu0
      %v1423 = vadd.f32 0.0, %v1422
      %v1424 = vpop.f32.mrf.mxu0
      %v1425 = vadd.f32 0.0, %v1424
      %1426 = vmatmul.bf16.gmra.mxu0 %v1373
      %v1427 = vpop.f32.mrf.mxu0
      %v1428 = vadd.f32 0.0, %v1427
      %v1429 = vpop.f32.mrf.mxu0
      %v1430 = vadd.f32 0.0, %v1429
      %1431 = vdwg.mxu0
      %v1432 = vadd.f32 %v1171, %v1388
      %v1433 = vadd.f32 %v1172, %v1390
      %v1434 = vadd.f32 %v1173, %v1393
      %v1435 = vadd.f32 %v1174, %v1395
      %v1436 = vadd.f32 %v1175, %v1398
      %v1437 = vadd.f32 %v1176, %v1400
      %v1438 = vadd.f32 %v1177, %v1403
      %v1439 = vadd.f32 %v1178, %v1405
      %v1440 = vadd.f32 %v1179, %v1408
      %v1441 = vadd.f32 %v1180, %v1410
      %v1442 = vadd.f32 %v1181, %v1413
      %v1443 = vadd.f32 %v1182, %v1415
      %v1444 = vadd.f32 %v1183, %v1418
      %v1445 = vadd.f32 %v1184, %v1420
      %v1446 = vadd.f32 %v1185, %v1423
      %v1447 = vadd.f32 %v1186, %v1425
      %v1448 = vadd.f32 %v1187, %v1428
      %v1449 = vadd.f32 %v1188, %v1430
      %1450 = vst [vmem:[#allocation2] sm:$0xff] %v1432
      %1451 = vst [vmem:[#allocation2 + $0x8] sm:$0xff] %v1433
      %1452 = vst [vmem:[#allocation2 + $0x10] sm:$0xff] %v1434
      %1453 = vst [vmem:[#allocation2 + $0x18] sm:$0xff] %v1435
      %1454 = vst [vmem:[#allocation2 + $0x20] sm:$0xff] %v1436
      %1455 = vst [vmem:[#allocation2 + $0x28] sm:$0xff] %v1437
      %1456 = vst [vmem:[#allocation2 + $0x30] sm:$0xff] %v1438
      %1457 = vst [vmem:[#allocation2 + $0x38] sm:$0xff] %v1439
      %1458 = vst [vmem:[#allocation2 + $0x40] sm:$0xff] %v1440
      %1459 = vst [vmem:[#allocation2 + $0x48] sm:$0xff] %v1441
      %1460 = vst [vmem:[#allocation2 + $0x50] sm:$0xff] %v1442
      %1461 = vst [vmem:[#allocation2 + $0x58] sm:$0xff] %v1443
      %1462 = vst [vmem:[#allocation2 + $0x60] sm:$0xff] %v1444
      %1463 = vst [vmem:[#allocation2 + $0x68] sm:$0xff] %v1445
      %1464 = vst [vmem:[#allocation2 + $0x70] sm:$0xff] %v1446
      %1465 = vst [vmem:[#allocation2 + $0x78] sm:$0xff] %v1447
      %1466 = vst [vmem:[#allocation2 + $0x80] sm:$0xff] %v1448
      %1467 = vst [vmem:[#allocation2 + $0x88] sm:$0xff] %v1449
      %v1468 = vld [vmem:[#allocation2] sm:$0xff]
      %v1469 = vld [vmem:[#allocation2 + $0x8] sm:$0xff]
      %v1470 = vld [vmem:[#allocation2 + $0x10] sm:$0xff]
      %v1471 = vld [vmem:[#allocation2 + $0x18] sm:$0xff]
      %v1472 = vld [vmem:[#allocation2 + $0x20] sm:$0xff]
      %v1473 = vld [vmem:[#allocation2 + $0x28] sm:$0xff]
      %v1474 = vld [vmem:[#allocation2 + $0x30] sm:$0xff]
      %v1475 = vld [vmem:[#allocation2 + $0x38] sm:$0xff]
      %v1476 = vld [vmem:[#allocation2 + $0x40] sm:$0xff]
      %v1477 = vld [vmem:[#allocation2 + $0x48] sm:$0xff]
      %v1478 = vld [vmem:[#allocation2 + $0x50] sm:$0xff]
      %v1479 = vld [vmem:[#allocation2 + $0x58] sm:$0xff]
      %v1480 = vld [vmem:[#allocation2 + $0x60] sm:$0xff]
      %v1481 = vld [vmem:[#allocation2 + $0x68] sm:$0xff]
      %v1482 = vld [vmem:[#allocation2 + $0x70] sm:$0xff]
      %v1483 = vld [vmem:[#allocation2 + $0x78] sm:$0xff]
      %v1484 = vld [vmem:[#allocation2 + $0x80] sm:$0xff]
      %v1485 = vld [vmem:[#allocation2 + $0x88] sm:$0xff]
      %v1486 = vld [vmem:[%s197 + $0x8] sm:$0xc]
      %v1487 = vld [vmem:[%s197 + $0xc] sm:$0xf]
      %v1488 = vld [vmem:[%s197 + $0x10] sm:$0xf]
      %v1489 = vld [vmem:[%s197 + $0x14] sm:$0xf]
      %v1490 = vld [vmem:[%s197 + $0x18] sm:$0xf]
      %v1491 = vld [vmem:[%s197 + $0x1c] sm:$0xf]
      %v1492 = vld [vmem:[%s197 + $0x20] sm:$0xf]
      %v1493 = vld [vmem:[%s197 + $0x24] sm:$0xf]
      %v1494 = vld [vmem:[%s197 + $0x28] sm:$0xf]
      %v1495 = vld [vmem:[%s197 + $0x2c] sm:$0xf]
      %v1496 = vld [vmem:[%s197 + $0x30] sm:$0xf]
      %v1497 = vld [vmem:[%s197 + $0x34] sm:$0xf]
      %v1498 = vld [vmem:[%s197 + $0x38] sm:$0xf]
      %v1499 = vld [vmem:[%s197 + $0x3c] sm:$0xf]
      %v1500 = vld [vmem:[%s197 + $0x40] sm:$0xf]
      %v1501 = vld [vmem:[%s197 + $0x44] sm:$0xf]
      %v1502 = vld [vmem:[%s197 + $0x48] sm:$0xf]
      %v1503 = vld [vmem:[%s197 + $0x4c] sm:$0xf]
      %v1504 = vld [vmem:[%s197 + $0x50] sm:$0x3]
      %s1505 = scalar_lea.vmem %s1, 10
      %v1506 = vld [vmem:[%s1505] sm:$0x3]
      %v1526 = vunpack.c.l.b16 %v1486
      %v1527 = vunpack.c.l.b16 %v1487
      %v1528 = vunpack.c.l.b16 %v1488
      %v1529 = vunpack.c.l.b16 %v1489
      %v1530 = vunpack.c.l.b16 %v1490
      %v1531 = vunpack.c.l.b16 %v1491
      %v1532 = vunpack.c.l.b16 %v1492
      %v1533 = vunpack.c.l.b16 %v1493
      %v1534 = vunpack.c.l.b16 %v1494
      %v1535 = vunpack.c.l.b16 %v1495
      %v1536 = vunpack.c.l.b16 %v1496
      %v1537 = vunpack.c.l.b16 %v1497
      %v1538 = vunpack.c.l.b16 %v1498
      %v1539 = vunpack.c.l.b16 %v1499
      %v1540 = vunpack.c.l.b16 %v1500
      %v1541 = vunpack.c.l.b16 %v1501
      %v1542 = vunpack.c.l.b16 %v1502
      %v1543 = vunpack.c.l.b16 %v1503
      %v1544 = vunpack.c.l.b16 %v1504
      %v1545 = vpack.c.b16 %v1527, %v1526
      %v1546 = vpack.c.b16 %v1529, %v1528
      %v1547 = vpack.c.b16 %v1531, %v1530
      %v1548 = vpack.c.b16 %v1533, %v1532
      %v1549 = vpack.c.b16 %v1535, %v1534
      %v1550 = vpack.c.b16 %v1537, %v1536
      %v1551 = vpack.c.b16 %v1539, %v1538
      %v1552 = vpack.c.b16 %v1541, %v1540
      %v1553 = vpack.c.b16 %v1543, %v1542
      %v1554 = vpack.c.b16 %v1544, %v1544
      %vm1555 = vcmask 1045504
      %v1556 = vrot.slane %v1545, 2
      %v1557 = vrot.slane %v1546, 2
      %v1558 = vsel %vm1555, %v1556, %v1557
      %v1559 = vrot.slane %v1547, 2
      %v1560 = vsel %vm1555, %v1557, %v1559
      %v1561 = vrot.slane %v1548, 2
      %v1562 = vsel %vm1555, %v1559, %v1561
      %v1563 = vrot.slane %v1549, 2
      %v1564 = vsel %vm1555, %v1561, %v1563
      %v1565 = vrot.slane %v1550, 2
      %v1566 = vsel %vm1555, %v1563, %v1565
      %v1567 = vrot.slane %v1551, 2
      %v1568 = vsel %vm1555, %v1565, %v1567
      %v1569 = vrot.slane %v1552, 2
      %v1570 = vsel %vm1555, %v1567, %v1569
      %v1571 = vrot.slane %v1553, 2
      %v1572 = vsel %vm1555, %v1569, %v1571
      %v1573 = vrot.slane %v1554, 2
      %v1574 = vsel %vm1555, %v1571, %v1573
      %v1576 = vsel %vm312, %v1558, 0
      %v1579 = vsel %vm312, %v1560, 0
      %v1582 = vsel %vm312, %v1562, 0
      %v1585 = vsel %vm312, %v1564, 0
      %v1588 = vsel %vm312, %v1566, 0
      %v1591 = vsel %vm312, %v1568, 0
      %v1594 = vsel %vm312, %v1570, 0
      %v1597 = vsel %vm312, %v1572, 0
      %v1600 = vsel %vm312, %v1574, 0
      %v1603 = vsel %vm340, %v1506, 0
      %1605 = vmatpush.bf16.msra.mxu0 0
      %1606 = vmatpush.bf16.msra.mxu0 0
      %1607 = vmatpush.bf16.msra.mxu0 0
      %1608 = vmatpush.bf16.msra.mxu0 0
      %1609 = vmatpush.bf16.msra.mxu0 0
      %1610 = vmatpush.bf16.msra.mxu0 0
      %1611 = vmatpush.bf16.msra.mxu0 0
      %1612 = vmatpush.bf16.msra.mxu0 %v1603
      %1613 = vmatmul.bf16.gmra.mxu0 %v1576
      %v1614 = vpop.f32.mrf.mxu0
      %v1615 = vadd.f32 0.0, %v1614
      %v1616 = vpop.f32.mrf.mxu0
      %v1617 = vadd.f32 0.0, %v1616
      %1618 = vmatmul.bf16.gmra.mxu0 %v1579
      %v1619 = vpop.f32.mrf.mxu0
      %v1620 = vadd.f32 0.0, %v1619
      %v1621 = vpop.f32.mrf.mxu0
      %v1622 = vadd.f32 0.0, %v1621
      %1623 = vmatmul.bf16.gmra.mxu0 %v1582
      %v1624 = vpop.f32.mrf.mxu0
      %v1625 = vadd.f32 0.0, %v1624
      %v1626 = vpop.f32.mrf.mxu0
      %v1627 = vadd.f32 0.0, %v1626
      %1628 = vmatmul.bf16.gmra.mxu0 %v1585
      %v1629 = vpop.f32.mrf.mxu0
      %v1630 = vadd.f32 0.0, %v1629
      %v1631 = vpop.f32.mrf.mxu0
      %v1632 = vadd.f32 0.0, %v1631
      %1633 = vmatmul.bf16.gmra.mxu0 %v1588
      %v1634 = vpop.f32.mrf.mxu0
      %v1635 = vadd.f32 0.0, %v1634
      %v1636 = vpop.f32.mrf.mxu0
      %v1637 = vadd.f32 0.0, %v1636
      %1638 = vmatmul.bf16.gmra.mxu0 %v1591
      %v1639 = vpop.f32.mrf.mxu0
      %v1640 = vadd.f32 0.0, %v1639
      %v1641 = vpop.f32.mrf.mxu0
      %v1642 = vadd.f32 0.0, %v1641
      %1643 = vmatmul.bf16.gmra.mxu0 %v1594
      %v1644 = vpop.f32.mrf.mxu0
      %v1645 = vadd.f32 0.0, %v1644
      %v1646 = vpop.f32.mrf.mxu0
      %v1647 = vadd.f32 0.0, %v1646
      %1648 = vmatmul.bf16.gmra.mxu0 %v1597
      %v1649 = vpop.f32.mrf.mxu0
      %v1650 = vadd.f32 0.0, %v1649
      %v1651 = vpop.f32.mrf.mxu0
      %v1652 = vadd.f32 0.0, %v1651
      %1653 = vmatmul.bf16.gmra.mxu0 %v1600
      %v1654 = vpop.f32.mrf.mxu0
      %v1655 = vadd.f32 0.0, %v1654
      %v1656 = vpop.f32.mrf.mxu0
      %v1657 = vadd.f32 0.0, %v1656
      %1658 = vdwg.mxu0
      %v1659 = vadd.f32 %v1468, %v1615
      %v1660 = vadd.f32 %v1469, %v1617
      %v1661 = vadd.f32 %v1470, %v1620
      %v1662 = vadd.f32 %v1471, %v1622
      %v1663 = vadd.f32 %v1472, %v1625
      %v1664 = vadd.f32 %v1473, %v1627
      %v1665 = vadd.f32 %v1474, %v1630
      %v1666 = vadd.f32 %v1475, %v1632
      %v1667 = vadd.f32 %v1476, %v1635
      %v1668 = vadd.f32 %v1477, %v1637
      %v1669 = vadd.f32 %v1478, %v1640
      %v1670 = vadd.f32 %v1479, %v1642
      %v1671 = vadd.f32 %v1480, %v1645
      %v1672 = vadd.f32 %v1481, %v1647
      %v1673 = vadd.f32 %v1482, %v1650
      %v1674 = vadd.f32 %v1483, %v1652
      %v1675 = vadd.f32 %v1484, %v1655
      %v1676 = vadd.f32 %v1485, %v1657
      %1677 = vst [vmem:[#allocation2] sm:$0xff] %v1659
      %1678 = vst [vmem:[#allocation2 + $0x8] sm:$0xff] %v1660
      %1679 = vst [vmem:[#allocation2 + $0x10] sm:$0xff] %v1661
      %1680 = vst [vmem:[#allocation2 + $0x18] sm:$0xff] %v1662
      %1681 = vst [vmem:[#allocation2 + $0x20] sm:$0xff] %v1663
      %1682 = vst [vmem:[#allocation2 + $0x28] sm:$0xff] %v1664
      %1683 = vst [vmem:[#allocation2 + $0x30] sm:$0xff] %v1665
      %1684 = vst [vmem:[#allocation2 + $0x38] sm:$0xff] %v1666
      %1685 = vst [vmem:[#allocation2 + $0x40] sm:$0xff] %v1667
      %1686 = vst [vmem:[#allocation2 + $0x48] sm:$0xff] %v1668
      %1687 = vst [vmem:[#allocation2 + $0x50] sm:$0xff] %v1669
      %1688 = vst [vmem:[#allocation2 + $0x58] sm:$0xff] %v1670
      %1689 = vst [vmem:[#allocation2 + $0x60] sm:$0xff] %v1671
      %1690 = vst [vmem:[#allocation2 + $0x68] sm:$0xff] %v1672
      %1691 = vst [vmem:[#allocation2 + $0x70] sm:$0xff] %v1673
      %1692 = vst [vmem:[#allocation2 + $0x78] sm:$0xff] %v1674
      %1693 = vst [vmem:[#allocation2 + $0x80] sm:$0xff] %v1675
      %1694 = vst [vmem:[#allocation2 + $0x88] sm:$0xff] %v1676
      %v1695 = vld [vmem:[#allocation2] sm:$0xff]
      %v1696 = vld [vmem:[#allocation2 + $0x8] sm:$0xff]
      %v1697 = vld [vmem:[#allocation2 + $0x10] sm:$0xff]
      %v1698 = vld [vmem:[#allocation2 + $0x18] sm:$0xff]
      %v1699 = vld [vmem:[#allocation2 + $0x20] sm:$0xff]
      %v1700 = vld [vmem:[#allocation2 + $0x28] sm:$0xff]
      %v1701 = vld [vmem:[#allocation2 + $0x30] sm:$0xff]
      %v1702 = vld [vmem:[#allocation2 + $0x38] sm:$0xff]
      %v1703 = vld [vmem:[#allocation2 + $0x40] sm:$0xff]
      %v1704 = vld [vmem:[#allocation2 + $0x48] sm:$0xff]
      %v1705 = vld [vmem:[#allocation2 + $0x50] sm:$0xff]
      %v1706 = vld [vmem:[#allocation2 + $0x58] sm:$0xff]
      %v1707 = vld [vmem:[#allocation2 + $0x60] sm:$0xff]
      %v1708 = vld [vmem:[#allocation2 + $0x68] sm:$0xff]
      %v1709 = vld [vmem:[#allocation2 + $0x70] sm:$0xff]
      %v1710 = vld [vmem:[#allocation2 + $0x78] sm:$0xff]
      %v1711 = vld [vmem:[#allocation2 + $0x80] sm:$0xff]
      %v1712 = vld [vmem:[#allocation2 + $0x88] sm:$0xff]
      %v1713 = vld [vmem:[%s197 + $0x10] sm:$0xc]
      %v1714 = vld [vmem:[%s197 + $0x14] sm:$0xf]
      %v1715 = vld [vmem:[%s197 + $0x18] sm:$0xf]
      %v1716 = vld [vmem:[%s197 + $0x1c] sm:$0xf]
      %v1717 = vld [vmem:[%s197 + $0x20] sm:$0xf]
      %v1718 = vld [vmem:[%s197 + $0x24] sm:$0xf]
      %v1719 = vld [vmem:[%s197 + $0x28] sm:$0xf]
      %v1720 = vld [vmem:[%s197 + $0x2c] sm:$0xf]
      %v1721 = vld [vmem:[%s197 + $0x30] sm:$0xf]
      %v1722 = vld [vmem:[%s197 + $0x34] sm:$0xf]
      %v1723 = vld [vmem:[%s197 + $0x38] sm:$0xf]
      %v1724 = vld [vmem:[%s197 + $0x3c] sm:$0xf]
      %v1725 = vld [vmem:[%s197 + $0x40] sm:$0xf]
      %v1726 = vld [vmem:[%s197 + $0x44] sm:$0xf]
      %v1727 = vld [vmem:[%s197 + $0x48] sm:$0xf]
      %v1728 = vld [vmem:[%s197 + $0x4c] sm:$0xf]
      %v1729 = vld [vmem:[%s197 + $0x50] sm:$0xf]
      %v1730 = vld [vmem:[%s197 + $0x54] sm:$0xf]
      %v1731 = vld [vmem:[%s197 + $0x58] sm:$0x3]
      %s1732 = scalar_lea.vmem %s1, 12
      %v1733 = vld [vmem:[%s1732] sm:$0x3]
      %v1753 = vunpack.c.l.b16 %v1713
      %v1754 = vunpack.c.l.b16 %v1714
      %v1755 = vunpack.c.l.b16 %v1715
      %v1756 = vunpack.c.l.b16 %v1716
      %v1757 = vunpack.c.l.b16 %v1717
      %v1758 = vunpack.c.l.b16 %v1718
      %v1759 = vunpack.c.l.b16 %v1719
      %v1760 = vunpack.c.l.b16 %v1720
      %v1761 = vunpack.c.l.b16 %v1721
      %v1762 = vunpack.c.l.b16 %v1722
      %v1763 = vunpack.c.l.b16 %v1723
      %v1764 = vunpack.c.l.b16 %v1724
      %v1765 = vunpack.c.l.b16 %v1725
      %v1766 = vunpack.c.l.b16 %v1726
      %v1767 = vunpack.c.l.b16 %v1727
      %v1768 = vunpack.c.l.b16 %v1728
      %v1769 = vunpack.c.l.b16 %v1729
      %v1770 = vunpack.c.l.b16 %v1730
      %v1771 = vunpack.c.l.b16 %v1731
      %v1772 = vpack.c.b16 %v1754, %v1753
      %v1773 = vpack.c.b16 %v1756, %v1755
      %v1774 = vpack.c.b16 %v1758, %v1757
      %v1775 = vpack.c.b16 %v1760, %v1759
      %v1776 = vpack.c.b16 %v1762, %v1761
      %v1777 = vpack.c.b16 %v1764, %v1763
      %v1778 = vpack.c.b16 %v1766, %v1765
      %v1779 = vpack.c.b16 %v1768, %v1767
      %v1780 = vpack.c.b16 %v1770, %v1769
      %v1781 = vpack.c.b16 %v1771, %v1771
      %v1782 = vrot.slane %v1772, 2
      %v1783 = vrot.slane %v1773, 2
      %v1784 = vsel %vm1555, %v1782, %v1783
      %v1785 = vrot.slane %v1774, 2
      %v1786 = vsel %vm1555, %v1783, %v1785
      %v1787 = vrot.slane %v1775, 2
      %v1788 = vsel %vm1555, %v1785, %v1787
      %v1789 = vrot.slane %v1776, 2
      %v1790 = vsel %vm1555, %v1787, %v1789
      %v1791 = vrot.slane %v1777, 2
      %v1792 = vsel %vm1555, %v1789, %v1791
      %v1793 = vrot.slane %v1778, 2
      %v1794 = vsel %vm1555, %v1791, %v1793
      %v1795 = vrot.slane %v1779, 2
      %v1796 = vsel %vm1555, %v1793, %v1795
      %v1797 = vrot.slane %v1780, 2
      %v1798 = vsel %vm1555, %v1795, %v1797
      %v1799 = vrot.slane %v1781, 2
      %v1800 = vsel %vm1555, %v1797, %v1799
      %v1802 = vsel %vm312, %v1784, 0
      %v1805 = vsel %vm312, %v1786, 0
      %v1808 = vsel %vm312, %v1788, 0
      %v1811 = vsel %vm312, %v1790, 0
      %v1814 = vsel %vm312, %v1792, 0
      %v1817 = vsel %vm312, %v1794, 0
      %v1820 = vsel %vm312, %v1796, 0
      %v1823 = vsel %vm312, %v1798, 0
      %v1826 = vsel %vm312, %v1800, 0
      %v1829 = vsel %vm340, %v1733, 0
      %1831 = vmatpush.bf16.msra.mxu0 0
      %1832 = vmatpush.bf16.msra.mxu0 0
      %1833 = vmatpush.bf16.msra.mxu0 0
      %1834 = vmatpush.bf16.msra.mxu0 0
      %1835 = vmatpush.bf16.msra.mxu0 0
      %1836 = vmatpush.bf16.msra.mxu0 0
      %1837 = vmatpush.bf16.msra.mxu0 0
      %1838 = vmatpush.bf16.msra.mxu0 %v1829
      %1839 = vmatmul.bf16.gmra.mxu0 %v1802
      %v1840 = vpop.f32.mrf.mxu0
      %v1841 = vadd.f32 0.0, %v1840
      %v1842 = vpop.f32.mrf.mxu0
      %v1843 = vadd.f32 0.0, %v1842
      %1844 = vmatmul.bf16.gmra.mxu0 %v1805
      %v1845 = vpop.f32.mrf.mxu0
      %v1846 = vadd.f32 0.0, %v1845
      %v1847 = vpop.f32.mrf.mxu0
      %v1848 = vadd.f32 0.0, %v1847
      %1849 = vmatmul.bf16.gmra.mxu0 %v1808
      %v1850 = vpop.f32.mrf.mxu0
      %v1851 = vadd.f32 0.0, %v1850
      %v1852 = vpop.f32.mrf.mxu0
      %v1853 = vadd.f32 0.0, %v1852
      %1854 = vmatmul.bf16.gmra.mxu0 %v1811
      %v1855 = vpop.f32.mrf.mxu0
      %v1856 = vadd.f32 0.0, %v1855
      %v1857 = vpop.f32.mrf.mxu0
      %v1858 = vadd.f32 0.0, %v1857
      %1859 = vmatmul.bf16.gmra.mxu0 %v1814
      %v1860 = vpop.f32.mrf.mxu0
      %v1861 = vadd.f32 0.0, %v1860
      %v1862 = vpop.f32.mrf.mxu0
      %v1863 = vadd.f32 0.0, %v1862
      %1864 = vmatmul.bf16.gmra.mxu0 %v1817
      %v1865 = vpop.f32.mrf.mxu0
      %v1866 = vadd.f32 0.0, %v1865
      %v1867 = vpop.f32.mrf.mxu0
      %v1868 = vadd.f32 0.0, %v1867
      %1869 = vmatmul.bf16.gmra.mxu0 %v1820
      %v1870 = vpop.f32.mrf.mxu0
      %v1871 = vadd.f32 0.0, %v1870
      %v1872 = vpop.f32.mrf.mxu0
      %v1873 = vadd.f32 0.0, %v1872
      %1874 = vmatmul.bf16.gmra.mxu0 %v1823
      %v1875 = vpop.f32.mrf.mxu0
      %v1876 = vadd.f32 0.0, %v1875
      %v1877 = vpop.f32.mrf.mxu0
      %v1878 = vadd.f32 0.0, %v1877
      %1879 = vmatmul.bf16.gmra.mxu0 %v1826
      %v1880 = vpop.f32.mrf.mxu0
      %v1881 = vadd.f32 0.0, %v1880
      %v1882 = vpop.f32.mrf.mxu0
      %v1883 = vadd.f32 0.0, %v1882
      %1884 = vdwg.mxu0
      %v1885 = vadd.f32 %v1695, %v1841
      %v1886 = vadd.f32 %v1696, %v1843
      %v1887 = vadd.f32 %v1697, %v1846
      %v1888 = vadd.f32 %v1698, %v1848
      %v1889 = vadd.f32 %v1699, %v1851
      %v1890 = vadd.f32 %v1700, %v1853
      %v1891 = vadd.f32 %v1701, %v1856
      %v1892 = vadd.f32 %v1702, %v1858
      %v1893 = vadd.f32 %v1703, %v1861
      %v1894 = vadd.f32 %v1704, %v1863
      %v1895 = vadd.f32 %v1705, %v1866
      %v1896 = vadd.f32 %v1706, %v1868
      %v1897 = vadd.f32 %v1707, %v1871
      %v1898 = vadd.f32 %v1708, %v1873
      %v1899 = vadd.f32 %v1709, %v1876
      %v1900 = vadd.f32 %v1710, %v1878
      %v1901 = vadd.f32 %v1711, %v1881
      %v1902 = vadd.f32 %v1712, %v1883
      %1903 = vst [vmem:[#allocation2] sm:$0xff] %v1885
      %1904 = vst [vmem:[#allocation2 + $0x8] sm:$0xff] %v1886
      %1905 = vst [vmem:[#allocation2 + $0x10] sm:$0xff] %v1887
      %1906 = vst [vmem:[#allocation2 + $0x18] sm:$0xff] %v1888
      %1907 = vst [vmem:[#allocation2 + $0x20] sm:$0xff] %v1889
      %1908 = vst [vmem:[#allocation2 + $0x28] sm:$0xff] %v1890
      %1909 = vst [vmem:[#allocation2 + $0x30] sm:$0xff] %v1891
      %1910 = vst [vmem:[#allocation2 + $0x38] sm:$0xff] %v1892
      %1911 = vst [vmem:[#allocation2 + $0x40] sm:$0xff] %v1893
      %1912 = vst [vmem:[#allocation2 + $0x48] sm:$0xff] %v1894
      %1913 = vst [vmem:[#allocation2 + $0x50] sm:$0xff] %v1895
      %1914 = vst [vmem:[#allocation2 + $0x58] sm:$0xff] %v1896
      %1915 = vst [vmem:[#allocation2 + $0x60] sm:$0xff] %v1897
      %1916 = vst [vmem:[#allocation2 + $0x68] sm:$0xff] %v1898
      %1917 = vst [vmem:[#allocation2 + $0x70] sm:$0xff] %v1899
      %1918 = vst [vmem:[#allocation2 + $0x78] sm:$0xff] %v1900
      %1919 = vst [vmem:[#allocation2 + $0x80] sm:$0xff] %v1901
      %1920 = vst [vmem:[#allocation2 + $0x88] sm:$0xff] %v1902
      %v1921 = vld [vmem:[#allocation2] sm:$0xff]
      %v1922 = vld [vmem:[#allocation2 + $0x8] sm:$0xff]
      %v1923 = vld [vmem:[#allocation2 + $0x10] sm:$0xff]
      %v1924 = vld [vmem:[#allocation2 + $0x18] sm:$0xff]
      %v1925 = vld [vmem:[#allocation2 + $0x20] sm:$0xff]
      %v1926 = vld [vmem:[#allocation2 + $0x28] sm:$0xff]
      %v1927 = vld [vmem:[#allocation2 + $0x30] sm:$0xff]
      %v1928 = vld [vmem:[#allocation2 + $0x38] sm:$0xff]
      %v1929 = vld [vmem:[#allocation2 + $0x40] sm:$0xff]
      %v1930 = vld [vmem:[#allocation2 + $0x48] sm:$0xff]
      %v1931 = vld [vmem:[#allocation2 + $0x50] sm:$0xff]
      %v1932 = vld [vmem:[#allocation2 + $0x58] sm:$0xff]
      %v1933 = vld [vmem:[#allocation2 + $0x60] sm:$0xff]
      %v1934 = vld [vmem:[#allocation2 + $0x68] sm:$0xff]
      %v1935 = vld [vmem:[#allocation2 + $0x70] sm:$0xff]
      %v1936 = vld [vmem:[#allocation2 + $0x78] sm:$0xff]
      %v1937 = vld [vmem:[#allocation2 + $0x80] sm:$0xff]
      %v1938 = vld [vmem:[#allocation2 + $0x88] sm:$0xff]
      %v1939 = vld [vmem:[%s197 + $0x10] sm:$0xc]
      %v1940 = vld [vmem:[%s197 + $0x14] sm:$0xf]
      %v1941 = vld [vmem:[%s197 + $0x18] sm:$0xf]
      %v1942 = vld [vmem:[%s197 + $0x1c] sm:$0xf]
      %v1943 = vld [vmem:[%s197 + $0x20] sm:$0xf]
      %v1944 = vld [vmem:[%s197 + $0x24] sm:$0xf]
      %v1945 = vld [vmem:[%s197 + $0x28] sm:$0xf]
      %v1946 = vld [vmem:[%s197 + $0x2c] sm:$0xf]
      %v1947 = vld [vmem:[%s197 + $0x30] sm:$0xf]
      %v1948 = vld [vmem:[%s197 + $0x34] sm:$0xf]
      %v1949 = vld [vmem:[%s197 + $0x38] sm:$0xf]
      %v1950 = vld [vmem:[%s197 + $0x3c] sm:$0xf]
      %v1951 = vld [vmem:[%s197 + $0x40] sm:$0xf]
      %v1952 = vld [vmem:[%s197 + $0x44] sm:$0xf]
      %v1953 = vld [vmem:[%s197 + $0x48] sm:$0xf]
      %v1954 = vld [vmem:[%s197 + $0x4c] sm:$0xf]
      %v1955 = vld [vmem:[%s197 + $0x50] sm:$0xf]
      %v1956 = vld [vmem:[%s197 + $0x54] sm:$0xf]
      %v1957 = vld [vmem:[%s197 + $0x58] sm:$0x7]
      %s1958 = scalar_lea.vmem %s1, 14
      %v1959 = vld [vmem:[%s1958] sm:$0x3]
      %v1979 = vunpack.c.l.b16 %v1939
      %v1980 = vunpack.c.l.b16 %v1940
      %v1981 = vunpack.c.l.b16 %v1941
      %v1982 = vunpack.c.l.b16 %v1942
      %v1983 = vunpack.c.l.b16 %v1943
      %v1984 = vunpack.c.l.b16 %v1944
      %v1985 = vunpack.c.l.b16 %v1945
      %v1986 = vunpack.c.l.b16 %v1946
      %v1987 = vunpack.c.l.b16 %v1947
      %v1988 = vunpack.c.l.b16 %v1948
      %v1989 = vunpack.c.l.b16 %v1949
      %v1990 = vunpack.c.l.b16 %v1950
      %v1991 = vunpack.c.l.b16 %v1951
      %v1992 = vunpack.c.l.b16 %v1952
      %v1993 = vunpack.c.l.b16 %v1953
      %v1994 = vunpack.c.l.b16 %v1954
      %v1995 = vunpack.c.l.b16 %v1955
      %v1996 = vunpack.c.l.b16 %v1956
      %v1997 = vunpack.c.l.b16 %v1957
      %v1998 = vpack.c.b16 %v1980, %v1979
      %v1999 = vpack.c.b16 %v1982, %v1981
      %v2000 = vpack.c.b16 %v1984, %v1983
      %v2001 = vpack.c.b16 %v1986, %v1985
      %v2002 = vpack.c.b16 %v1988, %v1987
      %v2003 = vpack.c.b16 %v1990, %v1989
      %v2004 = vpack.c.b16 %v1992, %v1991
      %v2005 = vpack.c.b16 %v1994, %v1993
      %v2006 = vpack.c.b16 %v1996, %v1995
      %v2007 = vpack.c.b16 %v1997, %v1997
      %vm2008 = vsmask.f32 5376
      %v2010 = vshrl.u32 %v1998, 16
      %v2012 = vrot.slane %v2010, 2
      %v2013 = vshll.u32 %v1998, 16
      %v2015 = vrot.slane %v2013, 3
      %v2016 = vor.u32 %v2012, %v2015
      %v2018 = vshrl.u32 %v1999, 16
      %v2020 = vrot.slane %v2018, 2
      %v2021 = vshll.u32 %v1999, 16
      %v2023 = vrot.slane %v2021, 3
      %v2024 = vor.u32 %v2020, %v2023
      %v2025 = vsel %vm2008, %v2016, %v2024
      %v2027 = vshrl.u32 %v2000, 16
      %v2029 = vrot.slane %v2027, 2
      %v2030 = vshll.u32 %v2000, 16
      %v2032 = vrot.slane %v2030, 3
      %v2033 = vor.u32 %v2029, %v2032
      %v2034 = vsel %vm2008, %v2024, %v2033
      %v2036 = vshrl.u32 %v2001, 16
      %v2038 = vrot.slane %v2036, 2
      %v2039 = vshll.u32 %v2001, 16
      %v2041 = vrot.slane %v2039, 3
      %v2042 = vor.u32 %v2038, %v2041
      %v2043 = vsel %vm2008, %v2033, %v2042
      %v2045 = vshrl.u32 %v2002, 16
      %v2047 = vrot.slane %v2045, 2
      %v2048 = vshll.u32 %v2002, 16
      %v2050 = vrot.slane %v2048, 3
      %v2051 = vor.u32 %v2047, %v2050
      %v2052 = vsel %vm2008, %v2042, %v2051
      %v2054 = vshrl.u32 %v2003, 16
      %v2056 = vrot.slane %v2054, 2
      %v2057 = vshll.u32 %v2003, 16
      %v2059 = vrot.slane %v2057, 3
      %v2060 = vor.u32 %v2056, %v2059
      %v2061 = vsel %vm2008, %v2051, %v2060
      %v2063 = vshrl.u32 %v2004, 16
      %v2065 = vrot.slane %v2063, 2
      %v2066 = vshll.u32 %v2004, 16
      %v2068 = vrot.slane %v2066, 3
      %v2069 = vor.u32 %v2065, %v2068
      %v2070 = vsel %vm2008, %v2060, %v2069
      %v2072 = vshrl.u32 %v2005, 16
      %v2074 = vrot.slane %v2072, 2
      %v2075 = vshll.u32 %v2005, 16
      %v2077 = vrot.slane %v2075, 3
      %v2078 = vor.u32 %v2074, %v2077
      %v2079 = vsel %vm2008, %v2069, %v2078
      %v2081 = vshrl.u32 %v2006, 16
      %v2083 = vrot.slane %v2081, 2
      %v2084 = vshll.u32 %v2006, 16
      %v2086 = vrot.slane %v2084, 3
      %v2087 = vor.u32 %v2083, %v2086
      %v2088 = vsel %vm2008, %v2078, %v2087
      %v2090 = vshrl.u32 %v2007, 16
      %v2092 = vrot.slane %v2090, 2
      %v2093 = vshll.u32 %v2007, 16
      %v2095 = vrot.slane %v2093, 3
      %v2096 = vor.u32 %v2092, %v2095
      %v2097 = vsel %vm2008, %v2087, %v2096
      %v2099 = vsel %vm312, %v2025, 0
      %v2102 = vsel %vm312, %v2034, 0
      %v2105 = vsel %vm312, %v2043, 0
      %v2108 = vsel %vm312, %v2052, 0
      %v2111 = vsel %vm312, %v2061, 0
      %v2114 = vsel %vm312, %v2070, 0
      %v2117 = vsel %vm312, %v2079, 0
      %v2120 = vsel %vm312, %v2088, 0
      %v2123 = vsel %vm312, %v2097, 0
      %v2126 = vsel %vm340, %v1959, 0
      %2128 = vmatpush.bf16.msra.mxu0 0
      %2129 = vmatpush.bf16.msra.mxu0 0
      %2130 = vmatpush.bf16.msra.mxu0 0
      %2131 = vmatpush.bf16.msra.mxu0 0
      %2132 = vmatpush.bf16.msra.mxu0 0
      %2133 = vmatpush.bf16.msra.mxu0 0
      %2134 = vmatpush.bf16.msra.mxu0 0
      %2135 = vmatpush.bf16.msra.mxu0 %v2126
      %2136 = vmatmul.bf16.gmra.mxu0 %v2099
      %v2137 = vpop.f32.mrf.mxu0
      %v2138 = vadd.f32 0.0, %v2137
      %v2139 = vpop.f32.mrf.mxu0
      %v2140 = vadd.f32 0.0, %v2139
      %2141 = vmatmul.bf16.gmra.mxu0 %v2102
      %v2142 = vpop.f32.mrf.mxu0
      %v2143 = vadd.f32 0.0, %v2142
      %v2144 = vpop.f32.mrf.mxu0
      %v2145 = vadd.f32 0.0, %v2144
      %2146 = vmatmul.bf16.gmra.mxu0 %v2105
      %v2147 = vpop.f32.mrf.mxu0
      %v2148 = vadd.f32 0.0, %v2147
      %v2149 = vpop.f32.mrf.mxu0
      %v2150 = vadd.f32 0.0, %v2149
      %2151 = vmatmul.bf16.gmra.mxu0 %v2108
      %v2152 = vpop.f32.mrf.mxu0
      %v2153 = vadd.f32 0.0, %v2152
      %v2154 = vpop.f32.mrf.mxu0
      %v2155 = vadd.f32 0.0, %v2154
      %2156 = vmatmul.bf16.gmra.mxu0 %v2111
      %v2157 = vpop.f32.mrf.mxu0
      %v2158 = vadd.f32 0.0, %v2157
      %v2159 = vpop.f32.mrf.mxu0
      %v2160 = vadd.f32 0.0, %v2159
      %2161 = vmatmul.bf16.gmra.mxu0 %v2114
      %v2162 = vpop.f32.mrf.mxu0
      %v2163 = vadd.f32 0.0, %v2162
      %v2164 = vpop.f32.mrf.mxu0
      %v2165 = vadd.f32 0.0, %v2164
      %2166 = vmatmul.bf16.gmra.mxu0 %v2117
      %v2167 = vpop.f32.mrf.mxu0
      %v2168 = vadd.f32 0.0, %v2167
      %v2169 = vpop.f32.mrf.mxu0
      %v2170 = vadd.f32 0.0, %v2169
      %2171 = vmatmul.bf16.gmra.mxu0 %v2120
      %v2172 = vpop.f32.mrf.mxu0
      %v2173 = vadd.f32 0.0, %v2172
      %v2174 = vpop.f32.mrf.mxu0
      %v2175 = vadd.f32 0.0, %v2174
      %2176 = vmatmul.bf16.gmra.mxu0 %v2123
      %v2177 = vpop.f32.mrf.mxu0
      %v2178 = vadd.f32 0.0, %v2177
      %v2179 = vpop.f32.mrf.mxu0
      %v2180 = vadd.f32 0.0, %v2179
      %2181 = vdwg.mxu0
      %v2182 = vadd.f32 %v1921, %v2138
      %v2183 = vadd.f32 %v1922, %v2140
      %v2184 = vadd.f32 %v1923, %v2143
      %v2185 = vadd.f32 %v1924, %v2145
      %v2186 = vadd.f32 %v1925, %v2148
      %v2187 = vadd.f32 %v1926, %v2150
      %v2188 = vadd.f32 %v1927, %v2153
      %v2189 = vadd.f32 %v1928, %v2155
      %v2190 = vadd.f32 %v1929, %v2158
      %v2191 = vadd.f32 %v1930, %v2160
      %v2192 = vadd.f32 %v1931, %v2163
      %v2193 = vadd.f32 %v1932, %v2165
      %v2194 = vadd.f32 %v1933, %v2168
      %v2195 = vadd.f32 %v1934, %v2170
      %v2196 = vadd.f32 %v1935, %v2173
      %v2197 = vadd.f32 %v1936, %v2175
      %v2198 = vadd.f32 %v1937, %v2178
      %v2199 = vadd.f32 %v1938, %v2180
      %2200 = vst [vmem:[#allocation2] sm:$0xff] %v2182
      %2201 = vst [vmem:[#allocation2 + $0x8] sm:$0xff] %v2183
      %2202 = vst [vmem:[#allocation2 + $0x10] sm:$0xff] %v2184
      %2203 = vst [vmem:[#allocation2 + $0x18] sm:$0xff] %v2185
      %2204 = vst [vmem:[#allocation2 + $0x20] sm:$0xff] %v2186
      %2205 = vst [vmem:[#allocation2 + $0x28] sm:$0xff] %v2187
      %2206 = vst [vmem:[#allocation2 + $0x30] sm:$0xff] %v2188
      %2207 = vst [vmem:[#allocation2 + $0x38] sm:$0xff] %v2189
      %2208 = vst [vmem:[#allocation2 + $0x40] sm:$0xff] %v2190
      %2209 = vst [vmem:[#allocation2 + $0x48] sm:$0xff] %v2191
      %2210 = vst [vmem:[#allocation2 + $0x50] sm:$0xff] %v2192
      %2211 = vst [vmem:[#allocation2 + $0x58] sm:$0xff] %v2193
      %2212 = vst [vmem:[#allocation2 + $0x60] sm:$0xff] %v2194
      %2213 = vst [vmem:[#allocation2 + $0x68] sm:$0xff] %v2195
      %2214 = vst [vmem:[#allocation2 + $0x70] sm:$0xff] %v2196
      %2215 = vst [vmem:[#allocation2 + $0x78] sm:$0xff] %v2197
      %2216 = vst [vmem:[#allocation2 + $0x80] sm:$0xff] %v2198
      %2217 = vst [vmem:[#allocation2 + $0x88] sm:$0xff] %v2199
      %v2218 = vld [vmem:[#allocation2] sm:$0xff]
      %v2219 = vld [vmem:[#allocation2 + $0x8] sm:$0xff]
      %v2220 = vld [vmem:[#allocation2 + $0x10] sm:$0xff]
      %v2221 = vld [vmem:[#allocation2 + $0x18] sm:$0xff]
      %v2222 = vld [vmem:[#allocation2 + $0x20] sm:$0xff]
      %v2223 = vld [vmem:[#allocation2 + $0x28] sm:$0xff]
      %v2224 = vld [vmem:[#allocation2 + $0x30] sm:$0xff]
      %v2225 = vld [vmem:[#allocation2 + $0x38] sm:$0xff]
      %v2226 = vld [vmem:[#allocation2 + $0x40] sm:$0xff]
      %v2227 = vld [vmem:[#allocation2 + $0x48] sm:$0xff]
      %v2228 = vld [vmem:[#allocation2 + $0x50] sm:$0xff]
      %v2229 = vld [vmem:[#allocation2 + $0x58] sm:$0xff]
      %v2230 = vld [vmem:[#allocation2 + $0x60] sm:$0xff]
      %v2231 = vld [vmem:[#allocation2 + $0x68] sm:$0xff]
      %v2232 = vld [vmem:[#allocation2 + $0x70] sm:$0xff]
      %v2233 = vld [vmem:[#allocation2 + $0x78] sm:$0xff]
      %v2234 = vld [vmem:[#allocation2 + $0x80] sm:$0xff]
      %v2235 = vld [vmem:[#allocation2 + $0x88] sm:$0xff]
      %v2236 = vld [vmem:[%s197 + $0x10] sm:$0x8]
      %v2237 = vld [vmem:[%s197 + $0x14] sm:$0xf]
      %v2238 = vld [vmem:[%s197 + $0x18] sm:$0xf]
      %v2239 = vld [vmem:[%s197 + $0x1c] sm:$0xf]
      %v2240 = vld [vmem:[%s197 + $0x20] sm:$0xf]
      %v2241 = vld [vmem:[%s197 + $0x24] sm:$0xf]
      %v2242 = vld [vmem:[%s197 + $0x28] sm:$0xf]
      %v2243 = vld [vmem:[%s197 + $0x2c] sm:$0xf]
      %v2244 = vld [vmem:[%s197 + $0x30] sm:$0xf]
      %v2245 = vld [vmem:[%s197 + $0x34] sm:$0xf]
      %v2246 = vld [vmem:[%s197 + $0x38] sm:$0xf]
      %v2247 = vld [vmem:[%s197 + $0x3c] sm:$0xf]
      %v2248 = vld [vmem:[%s197 + $0x40] sm:$0xf]
      %v2249 = vld [vmem:[%s197 + $0x44] sm:$0xf]
      %v2250 = vld [vmem:[%s197 + $0x48] sm:$0xf]
      %v2251 = vld [vmem:[%s197 + $0x4c] sm:$0xf]
      %v2252 = vld [vmem:[%s197 + $0x50] sm:$0xf]
      %v2253 = vld [vmem:[%s197 + $0x54] sm:$0xf]
      %v2254 = vld [vmem:[%s197 + $0x58] sm:$0x7]
      %s2255 = scalar_lea.vmem %s1, 16
      %v2256 = vld [vmem:[%s2255] sm:$0x3]
      %v2276 = vunpack.c.l.b16 %v2236
      %v2277 = vunpack.c.l.b16 %v2237
      %v2278 = vunpack.c.l.b16 %v2238
      %v2279 = vunpack.c.l.b16 %v2239
      %v2280 = vunpack.c.l.b16 %v2240
      %v2281 = vunpack.c.l.b16 %v2241
      %v2282 = vunpack.c.l.b16 %v2242
      %v2283 = vunpack.c.l.b16 %v2243
      %v2284 = vunpack.c.l.b16 %v2244
      %v2285 = vunpack.c.l.b16 %v2245
      %v2286 = vunpack.c.l.b16 %v2246
      %v2287 = vunpack.c.l.b16 %v2247
      %v2288 = vunpack.c.l.b16 %v2248
      %v2289 = vunpack.c.l.b16 %v2249
      %v2290 = vunpack.c.l.b16 %v2250
      %v2291 = vunpack.c.l.b16 %v2251
      %v2292 = vunpack.c.l.b16 %v2252
      %v2293 = vunpack.c.l.b16 %v2253
      %v2294 = vunpack.c.l.b16 %v2254
      %v2295 = vpack.c.b16 %v2277, %v2276
      %v2296 = vpack.c.b16 %v2279, %v2278
      %v2297 = vpack.c.b16 %v2281, %v2280
      %v2298 = vpack.c.b16 %v2283, %v2282
      %v2299 = vpack.c.b16 %v2285, %v2284
      %v2300 = vpack.c.b16 %v2287, %v2286
      %v2301 = vpack.c.b16 %v2289, %v2288
      %v2302 = vpack.c.b16 %v2291, %v2290
      %v2303 = vpack.c.b16 %v2293, %v2292
      %v2304 = vpack.c.b16 %v2294, %v2294
      %vm2305 = vcmask 1044480
      %v2306 = vrot.slane %v2295, 3
      %v2307 = vrot.slane %v2296, 3
      %v2308 = vsel %vm2305, %v2306, %v2307
      %v2309 = vrot.slane %v2297, 3
      %v2310 = vsel %vm2305, %v2307, %v2309
      %v2311 = vrot.slane %v2298, 3
      %v2312 = vsel %vm2305, %v2309, %v2311
      %v2313 = vrot.slane %v2299, 3
      %v2314 = vsel %vm2305, %v2311, %v2313
      %v2315 = vrot.slane %v2300, 3
      %v2316 = vsel %vm2305, %v2313, %v2315
      %v2317 = vrot.slane %v2301, 3
      %v2318 = vsel %vm2305, %v2315, %v2317
      %v2319 = vrot.slane %v2302, 3
      %v2320 = vsel %vm2305, %v2317, %v2319
      %v2321 = vrot.slane %v2303, 3
      %v2322 = vsel %vm2305, %v2319, %v2321
      %v2323 = vrot.slane %v2304, 3
      %v2324 = vsel %vm2305, %v2321, %v2323
      %v2326 = vsel %vm312, %v2308, 0
      %v2329 = vsel %vm312, %v2310, 0
      %v2332 = vsel %vm312, %v2312, 0
      %v2335 = vsel %vm312, %v2314, 0
      %v2338 = vsel %vm312, %v2316, 0
      %v2341 = vsel %vm312, %v2318, 0
      %v2344 = vsel %vm312, %v2320, 0
      %v2347 = vsel %vm312, %v2322, 0
      %v2350 = vsel %vm312, %v2324, 0
      %v2353 = vsel %vm340, %v2256, 0
      %2355 = vmatpush.bf16.msra.mxu0 0
      %2356 = vmatpush.bf16.msra.mxu0 0
      %2357 = vmatpush.bf16.msra.mxu0 0
      %2358 = vmatpush.bf16.msra.mxu0 0
      %2359 = vmatpush.bf16.msra.mxu0 0
      %2360 = vmatpush.bf16.msra.mxu0 0
      %2361 = vmatpush.bf16.msra.mxu0 0
      %2362 = vmatpush.bf16.msra.mxu0 %v2353
      %2363 = vmatmul.bf16.gmra.mxu0 %v2326
      %v2364 = vpop.f32.mrf.mxu0
      %v2365 = vadd.f32 0.0, %v2364
      %v2366 = vpop.f32.mrf.mxu0
      %v2367 = vadd.f32 0.0, %v2366
      %2368 = vmatmul.bf16.gmra.mxu0 %v2329
      %v2369 = vpop.f32.mrf.mxu0
      %v2370 = vadd.f32 0.0, %v2369
      %v2371 = vpop.f32.mrf.mxu0
      %v2372 = vadd.f32 0.0, %v2371
      %2373 = vmatmul.bf16.gmra.mxu0 %v2332
      %v2374 = vpop.f32.mrf.mxu0
      %v2375 = vadd.f32 0.0, %v2374
      %v2376 = vpop.f32.mrf.mxu0
      %v2377 = vadd.f32 0.0, %v2376
      %2378 = vmatmul.bf16.gmra.mxu0 %v2335
      %v2379 = vpop.f32.mrf.mxu0
      %v2380 = vadd.f32 0.0, %v2379
      %v2381 = vpop.f32.mrf.mxu0
      %v2382 = vadd.f32 0.0, %v2381
      %2383 = vmatmul.bf16.gmra.mxu0 %v2338
      %v2384 = vpop.f32.mrf.mxu0
      %v2385 = vadd.f32 0.0, %v2384
      %v2386 = vpop.f32.mrf.mxu0
      %v2387 = vadd.f32 0.0, %v2386
      %2388 = vmatmul.bf16.gmra.mxu0 %v2341
      %v2389 = vpop.f32.mrf.mxu0
      %v2390 = vadd.f32 0.0, %v2389
      %v2391 = vpop.f32.mrf.mxu0
      %v2392 = vadd.f32 0.0, %v2391
      %2393 = vmatmul.bf16.gmra.mxu0 %v2344
      %v2394 = vpop.f32.mrf.mxu0
      %v2395 = vadd.f32 0.0, %v2394
      %v2396 = vpop.f32.mrf.mxu0
      %v2397 = vadd.f32 0.0, %v2396
      %2398 = vmatmul.bf16.gmra.mxu0 %v2347
      %v2399 = vpop.f32.mrf.mxu0
      %v2400 = vadd.f32 0.0, %v2399
      %v2401 = vpop.f32.mrf.mxu0
      %v2402 = vadd.f32 0.0, %v2401
      %2403 = vmatmul.bf16.gmra.mxu0 %v2350
      %v2404 = vpop.f32.mrf.mxu0
      %v2405 = vadd.f32 0.0, %v2404
      %v2406 = vpop.f32.mrf.mxu0
      %v2407 = vadd.f32 0.0, %v2406
      %2408 = vdwg.mxu0
      %v2409 = vadd.f32 %v2218, %v2365
      %v2410 = vadd.f32 %v2219, %v2367
      %v2411 = vadd.f32 %v2220, %v2370
      %v2412 = vadd.f32 %v2221, %v2372
      %v2413 = vadd.f32 %v2222, %v2375
      %v2414 = vadd.f32 %v2223, %v2377
      %v2415 = vadd.f32 %v2224, %v2380
      %v2416 = vadd.f32 %v2225, %v2382
      %v2417 = vadd.f32 %v2226, %v2385
      %v2418 = vadd.f32 %v2227, %v2387
      %v2419 = vadd.f32 %v2228, %v2390
      %v2420 = vadd.f32 %v2229, %v2392
      %v2421 = vadd.f32 %v2230, %v2395
      %v2422 = vadd.f32 %v2231, %v2397
      %v2423 = vadd.f32 %v2232, %v2400
      %v2424 = vadd.f32 %v2233, %v2402
      %v2425 = vadd.f32 %v2234, %v2405
      %v2426 = vadd.f32 %v2235, %v2407
      %2427 = vst [vmem:[#allocation2] sm:$0xff] %v2409
      %2428 = vst [vmem:[#allocation2 + $0x8] sm:$0xff] %v2410
      %2429 = vst [vmem:[#allocation2 + $0x10] sm:$0xff] %v2411
      %2430 = vst [vmem:[#allocation2 + $0x18] sm:$0xff] %v2412
      %2431 = vst [vmem:[#allocation2 + $0x20] sm:$0xff] %v2413
      %2432 = vst [vmem:[#allocation2 + $0x28] sm:$0xff] %v2414
      %2433 = vst [vmem:[#allocation2 + $0x30] sm:$0xff] %v2415
      %2434 = vst [vmem:[#allocation2 + $0x38] sm:$0xff] %v2416
      %2435 = vst [vmem:[#allocation2 + $0x40] sm:$0xff] %v2417
      %2436 = vst [vmem:[#allocation2 + $0x48] sm:$0xff] %v2418
      %2437 = vst [vmem:[#allocation2 + $0x50] sm:$0xff] %v2419
      %2438 = vst [vmem:[#allocation2 + $0x58] sm:$0xff] %v2420
      %2439 = vst [vmem:[#allocation2 + $0x60] sm:$0xff] %v2421
      %2440 = vst [vmem:[#allocation2 + $0x68] sm:$0xff] %v2422
      %2441 = vst [vmem:[#allocation2 + $0x70] sm:$0xff] %v2423
      %2442 = vst [vmem:[#allocation2 + $0x78] sm:$0xff] %v2424
      %2443 = vst [vmem:[#allocation2 + $0x80] sm:$0xff] %v2425
      %2444 = vst [vmem:[#allocation2 + $0x88] sm:$0xff] %v2426
      %v2445 = vld [vmem:[#allocation2] sm:$0xff]
      %v2446 = vld [vmem:[#allocation2 + $0x8] sm:$0xff]
      %v2447 = vld [vmem:[#allocation2 + $0x10] sm:$0xff]
      %v2448 = vld [vmem:[#allocation2 + $0x18] sm:$0xff]
      %v2449 = vld [vmem:[#allocation2 + $0x20] sm:$0xff]
      %v2450 = vld [vmem:[#allocation2 + $0x28] sm:$0xff]
      %v2451 = vld [vmem:[#allocation2 + $0x30] sm:$0xff]
      %v2452 = vld [vmem:[#allocation2 + $0x38] sm:$0xff]
      %v2453 = vld [vmem:[#allocation2 + $0x40] sm:$0xff]
      %v2454 = vld [vmem:[#allocation2 + $0x48] sm:$0xff]
      %v2455 = vld [vmem:[#allocation2 + $0x50] sm:$0xff]
      %v2456 = vld [vmem:[#allocation2 + $0x58] sm:$0xff]
      %v2457 = vld [vmem:[#allocation2 + $0x60] sm:$0xff]
      %v2458 = vld [vmem:[#allocation2 + $0x68] sm:$0xff]
      %v2459 = vld [vmem:[#allocation2 + $0x70] sm:$0xff]
      %v2460 = vld [vmem:[#allocation2 + $0x78] sm:$0xff]
      %v2461 = vld [vmem:[#allocation2 + $0x80] sm:$0xff]
      %v2462 = vld [vmem:[#allocation2 + $0x88] sm:$0xff]
      %v2463 = vmax.f32 %v2445, 0.0
      %v2464 = vmax.f32 %v2446, 0.0
      %v2465 = vmax.f32 %v2447, 0.0
      %v2466 = vmax.f32 %v2448, 0.0
      %v2467 = vmax.f32 %v2449, 0.0
      %v2468 = vmax.f32 %v2450, 0.0
      %v2469 = vmax.f32 %v2451, 0.0
      %v2470 = vmax.f32 %v2452, 0.0
      %v2471 = vmax.f32 %v2453, 0.0
      %v2472 = vmax.f32 %v2454, 0.0
      %v2473 = vmax.f32 %v2455, 0.0
      %v2474 = vmax.f32 %v2456, 0.0
      %v2475 = vmax.f32 %v2457, 0.0
      %v2476 = vmax.f32 %v2458, 0.0
      %v2477 = vmax.f32 %v2459, 0.0
      %v2478 = vmax.f32 %v2460, 0.0
      %v2479 = vmax.f32 %v2461, 0.0
      %v2480 = vmax.f32 %v2462, 0.0
      %2481 = vst [vmem:[%s206] sm:$0xff] %v2463
      %2482 = vst [vmem:[%s206 + $0x8] sm:$0xff] %v2464
      %2483 = vst [vmem:[%s206 + $0x10] sm:$0xff] %v2465
      %2484 = vst [vmem:[%s206 + $0x18] sm:$0xff] %v2466
      %2485 = vst [vmem:[%s206 + $0x20] sm:$0xff] %v2467
      %2486 = vst [vmem:[%s206 + $0x28] sm:$0xff] %v2468
      %2487 = vst [vmem:[%s206 + $0x30] sm:$0xff] %v2469
      %2488 = vst [vmem:[%s206 + $0x38] sm:$0xff] %v2470
      %2489 = vst [vmem:[%s206 + $0x40] sm:$0xff] %v2471
      %2490 = vst [vmem:[%s206 + $0x48] sm:$0xff] %v2472
      %2491 = vst [vmem:[%s206 + $0x50] sm:$0xff] %v2473
      %2492 = vst [vmem:[%s206 + $0x58] sm:$0xff] %v2474
      %2493 = vst [vmem:[%s206 + $0x60] sm:$0xff] %v2475
      %2494 = vst [vmem:[%s206 + $0x68] sm:$0xff] %v2476
      %2495 = vst [vmem:[%s206 + $0x70] sm:$0xff] %v2477
      %2496 = vst [vmem:[%s206 + $0x78] sm:$0xff] %v2478
      %2497 = vst [vmem:[%s206 + $0x80] sm:$0xff] %v2479
      %2498 = vst [vmem:[%s206 + $0x88] sm:$0xff] %v2480
      %p2499 = scmp.lt.s32.totalorder %s18, 1
      %s2500 = scalar_select %p2499, %s18, 1
      %p2501 = scmp.lt.s32.totalorder %s19, 1
      %s2502 = scalar_select %p2501, %s19, 1
      %s2503 = smul.addr %s2502, 18
      %s2504 = smul.addr %s2500, 36
      %s2505 = sadd.s32 %s2503, %s2504
      %s2506 = smul.addr %s2505, 8
      %s2507 = scalar_lea.vmem %s3, %s2506
      // Predicated region
      $region33: #{conv_relu.1} parent=31 // pred_check
        %p2508 = pneg %p116
      $region34: #{conv_relu.1} parent=31 // pred_check_branch
        %2510 = sbr.rel (%p2508) target = $region36
      $region35: #{conv_relu.1} parent=31 // pred_region
        _
      $region36: #{conv_relu.1} parent=31 // pred_fallthru
        _
    $region32: #{conv_relu.1} parent=5 // pred_fallthru
      _
    %p2511 = scmp.le.s32.totalorder 2, %s9
    // Predicated region
    $region37: #{conv_relu.1} parent=5 // pred_check
      %p2512 = pneg %p2511
    $region38: #{conv_relu.1} parent=5 // pred_check_branch
      %2514 = sbr.rel (%p2512) target = $region40
    $region39: #{conv_relu.1} parent=5 // pred_region
      %s2515 = ssub.s32 %s9, 2
      // Predicated region
      $region41: #{conv_relu.1} parent=39 // pred_check
        %p2516 = pneg %p122
      $region42: #{conv_relu.1} parent=39 // pred_check_branch
        %2518 = sbr.rel (%p2516) target = $region44
      $region43: #{conv_relu.1} parent=39 // pred_region
        %p2519 = scmp.lt.s32.totalorder %s20, 1
        %s2520 = scalar_select %p2519, %s20, 1
        %p2521 = scmp.lt.s32.totalorder %s21, 1
        %s2522 = scalar_select %p2521, %s21, 1
        %s2523 = smul.addr %s2522, 18
        %s2524 = smul.addr %s2520, 36
        %s2525 = sadd.s32 %s2523, %s2524
        %s2526 = smul.addr %s2525, 8
        %s2527 = scalar_lea.vmem %s3, %s2526
      $region44: #{conv_relu.1} parent=39 // pred_fallthru
        _
    $region40: #{conv_relu.1} parent=5 // pred_fallthru
      _
  $region6: #{conv_relu.1} parent=0 // loop_footer
    %s13 = sadd.s32 1, %s9
  $region7: #{conv_relu.1} parent=0 // loop_footer_branch
    %8 = sbr.rel target = $region3
  $region8: #{conv_relu.1} parent=0 // loop_exit
    _

</llo_original>
